<compile_context>
chip_gen: v7x
topology: tpu7x:2x2x1
jax: 0.10.0
libtpu: 0.0.40
codegen_flags: <defaults>
</compile_context>

<pallas_src>
import jax
import jax.numpy as jnp
from jax import lax
from jax.experimental import pallas as pl
from jax.experimental.pallas import tpu as pltpu


# ----------------------------- small helpers ------------------------------

def _round_up(x, m):
    return ((x + m - 1) // m) * m


def _pad2(a, shape, fill=0):
    pads = [(0, s - d) for s, d in zip(shape, a.shape)]
    return jnp.pad(a, pads, constant_values=fill)


def _pick_tile_b(B, requested=None):
    if requested is not None:
        tb = _round_up(max(int(requested), 16), 16)
    else:
        tb = 256
    tb = min(tb, _round_up(max(B, 16), 16))
    if B > 16:
        # keep >= 2 batch tiles so both v7x TensorCores get work, but don't
        # drop below 128 rows (MXU LHS fill) unless the batch itself is small
        tb = min(tb, max(128, _round_up(pl.cdiv(B, 2), 16)))
        tb = min(tb, _round_up(max(B, 16), 16))
    return max(16, tb)


# ------------------------------ forward pass -------------------------------

def adaptive_bce_with_logits_loss(x, target, params, cfg, tile_b=None):
    cutf = [int(c) for c in cfg["cutoffs"]]          # [c0, c1, ..., n_classes]
    n_classes = cutf[-1]
    shortlist = cutf[0]
    nc = len(cutf) - 1
    assert 1 <= nc <= 128, "kernel assumes at most 128 clusters"
    B, F = x.shape
    L = int(target.shape[1])
    H = shortlist + nc

    hszs = [int(w.shape[1]) for w in params["w1t"]]
    oszs = [int(w.shape[1]) for w in params["w2t"]]

    # padded (lane / MXU friendly) sizes
    F_pad = _round_up(F, 128)
    H_pad = _round_up(H, 128)
    # TODO(synk): pad each cluster to its own round_up(hsz/osz, 128) with grouped
    # grid segments instead of the global max, to avoid masked work on small
    # tail clusters.
    HSZ_pad = _round_up(max(hszs), 128)
    OSZ_pad = _round_up(max(oszs), 128)

    tile_b = _pick_tile_b(B, tile_b)
    nb = pl.cdiv(B, tile_b)
    B_pad = nb * tile_b

    # ---- glue: pad / stack / cast (one-time layout plumbing, not compute) ----
    xp = _pad2(x, (B_pad, F_pad)).astype(jnp.bfloat16)
    # padded batch rows get label id == n_classes -> never matches any class
    tgt = _pad2(target.astype(jnp.int32), (B_pad, L), fill=n_classes)
    whp = _pad2(params["w_head_t"], (F_pad, H_pad)).astype(jnp.bfloat16)
    # root columns of the head weight, lane-aligned to [0, nc): one small extra
    # matmul per batch tile replaces the per-cluster full-width root extraction
    whr = _pad2(params["w_head_t"][:, shortlist:shortlist + nc],
                (F_pad, 128)).astype(jnp.bfloat16)
    hpw = _pad2(params["head_pw"].reshape(1, -1), (1, H_pad)).astype(jnp.float32)
    low_lane = jnp.array([cutf[k] for k in range(nc)] + [n_classes] * (128 - nc),
                         dtype=jnp.int32).reshape(1, 128)
    size_lane = jnp.array(oszs + [0] * (128 - nc),
                          dtype=jnp.int32).reshape(1, 128)

    w1s = jnp.stack([_pad2(w, (F_pad, HSZ_pad)) for w in params["w1t"]]).astype(jnp.bfloat16)
    w2s = jnp.stack([_pad2(w, (HSZ_pad, OSZ_pad)) for w in params["w2t"]]).astype(jnp.bfloat16)
    gms = jnp.stack([_pad2(g, (1, HSZ_pad)) for g in params["gamma"]]).astype(jnp.float32)
    bts = jnp.stack([_pad2(b, (1, HSZ_pad)) for b in params["beta"]]).astype(jnp.float32)
    cpw = jnp.stack([_pad2(p.reshape(1, -1), (1, OSZ_pad))
                     for p in params["cluster_pw"]]).astype(jnp.float32)
    # per-cluster metadata read per grid step from SMEM: [low, osz, hsz, _]
    meta = jnp.array([[cutf[k], oszs[k], hszs[k], 0] for k in range(nc)],
                     dtype=jnp.int32)

    # -------- VMEM budget (sized for v7x's 64 MiB/TC) and weight residency ----
    def _fp(rows, cols, itemsize, lead=1):
        return lead * _round_up(max(rows, 1), 8) * _round_up(max(cols, 1), 128) * itemsize

    w_stack_bytes = (_fp(F_pad, HSZ_pad, 2, nc) + _fp(HSZ_pad, OSZ_pad, 2, nc)
                     + 2 * _fp(1, HSZ_pad, 4, nc) + _fp(1, OSZ_pad, 4, nc))
    w_block_bytes = w_stack_bytes // nc
    base_bytes = (2 * _fp(tile_b, F_pad, 2)        # x (double buffered)
                  + 2 * _fp(tile_b, L, 4)          # targets
                  + 2 * _fp(F_pad, H_pad, 2)       # head weight
                  + 2 * _fp(F_pad, 128, 2)         # root columns of head weight
                  + 2 * _fp(1, H_pad, 4)           # head pos_weight
                  + 4 * _fp(1, 128, 4)             # low / size lane tables
                  + 2 * _fp(1, 128, 4)             # output block
                  + 2 * _fp(tile_b, 1, 4)          # acc / num scratch
                  + _fp(tile_b, 128, 4))           # roots scratch

    VMEM_SAFE = 56 * 1024 * 1024
    weights_resident = (base_bytes + 2 * w_stack_bytes) <= int(0.85 * VMEM_SAFE)
    need = base_bytes + 2 * (w_stack_bytes if weights_resident else w_block_bytes)
    vmem_limit = int(min(VMEM_SAFE, max(2 * need, 32 * 1024 * 1024)))

    # ------------------------------ fused kernel ---------------------------
    def kernel(meta_ref,                       # SMEM (nc, 4) int32 (prefetch)
               x_ref, tgt_ref, wh_ref, whr_ref, hpw_ref, low_ref, size_ref,
               w1_ref, g_ref, b_ref, w2_ref, cpw_ref,
               out_ref,                        # (1, 1, 128) f32
               acc_scr, num_scr, roots_scr):   # VMEM scratch
        i = pl.program_id(0)                   # batch-tile index (parallel)
        j = pl.program_id(1)                   # cluster index (arbitrary, inner)
        x = x_ref[...]                         # (tile_b, F_pad) bf16, resident over j
        tg = tgt_ref[...]                      # (tile_b, L) int32

        # -------------------- head phase (once per batch tile) ------------------
        @pl.when(j == 0)
        def _head():
            logits = jnp.dot(x, wh_ref[...], preferred_element_type=jnp.float32)
            roots = jnp.dot(x, whr_ref[...], preferred_element_type=jnp.float32)
            roots_scr[...] = roots             # lane k == root logit of cluster k

            col = lax.broadcasted_iota(jnp.int32, (tile_b, H_pad), 1)
            hit = (col == tg[:, 0:1])
            for l in range(1, L):
                hit = hit | (col == tg[:, l:l + 1])
            smask = col < shortlist
            t_s = (hit & smask).astype(jnp.float32)      # shortlist multi-hot
            smask_f = smask.astype(jnp.float32)

            # one shared exp(-|z|) for both softplus branches
            lg = jnp.log1p(jnp.exp(-jnp.abs(logits)))
            sp_neg = jnp.maximum(-logits, 0.0) + lg      # -log sigmoid(z)
            sp_pos = jnp.maximum(logits, 0.0) + lg       # -log(1 - sigmoid(z))
            head_elem = hpw_ref[...] * t_s * sp_neg + (1.0 - t_s) * sp_pos
            head_short = jnp.sum(head_elem * smask_f, axis=1, keepdims=True)

            # narrow (tile_b, 128) cluster indicators / root-column loss / num
            lowv = low_ref[...]                          # (1, 128) int32
            sizev = size_ref[...]                        # (1, 128) int32
            highv = lowv + sizev
            ind = (tg[:, 0:1] >= lowv) & (tg[:, 0:1] < highv)
            for l in range(1, L):
                tl = tg[:, l:l + 1]
                ind = ind | ((tl >= lowv) & (tl < highv))
            ind_f = ind.astype(jnp.float32)              # row-in-cluster indicator
            kmask = (lax.broadcasted_iota(jnp.int32, (1, 128), 1) < nc
                     ).astype(jnp.float32)

            # masked root-column BCE:
            # (1-ind)*[pw*ind*softplus(-z) + (1-ind)*softplus(z)] = (1-ind)*softplus(z)
            sp_root = jnp.maximum(roots, 0.0) + jnp.log1p(jnp.exp(-jnp.abs(roots)))
            root_loss = jnp.sum(kmask * (1.0 - ind_f) * sp_root,
                                axis=1, keepdims=True)

            sizef = sizev.astype(jnp.float32)
            num = float(shortlist) + jnp.sum(
                kmask * (1.0 - ind_f + ind_f * sizef), axis=1, keepdims=True)

            acc_scr[...] = head_short + root_loss
            num_scr[...] = num

        # -------------------- cluster phase (every j) --------------------
        low = meta_ref[j, 0]
        osz = meta_ref[j, 1]
        hsz = meta_ref[j, 2]

        def _wblk(ref):
            # resident: full stack in VMEM, index by cluster; streamed: block j
            return ref[j] if weights_resident else ref[0]

        w1 = _wblk(w1_ref)                     # (F_pad, HSZ_pad) bf16
        gma = _wblk(g_ref)                     # (1, HSZ_pad) f32
        bta = _wblk(b_ref)                     # (1, HSZ_pad) f32
        w2 = _wblk(w2_ref)                     # (HSZ_pad, OSZ_pad) bf16
        cpwj = _wblk(cpw_ref)                  # (1, OSZ_pad) f32

        h = jnp.dot(x, w1, preferred_element_type=jnp.float32)   # (tile_b, HSZ_pad)
        hcol = lax.broadcasted_iota(jnp.int32, (tile_b, HSZ_pad), 1)
        hmask = (hcol < hsz).astype(jnp.float32)
        inv_h = 1.0 / hsz.astype(jnp.float32)
        mu = jnp.sum(h * hmask, axis=1, keepdims=True) * inv_h
        d = (h - mu) * hmask
        var = jnp.sum(d * d, axis=1, keepdims=True) * inv_h
        hn = (h - mu) * lax.rsqrt(var + 1e-5) * gma + bta        # padded cols -> 0
        hr = jnp.maximum(hn, 0.0)
        zc = jnp.dot(hr.astype(jnp.bfloat16), w2,
                     preferred_element_type=jnp.float32)          # (tile_b, OSZ_pad)

        # multi-hot cluster target + row indicator, built from raw labels
        ocol = lax.broadcasted_iota(jnp.int32, (tile_b, OSZ_pad), 1)
        cls_id = ocol + low
        t = (tg[:, 0:1] == cls_id)
        indr = (tg[:, 0:1] >= low) & (tg[:, 0:1] < low + osz)
        for l in range(1, L):
            tl = tg[:, l:l + 1]
            t = t | (tl == cls_id)
            indr = indr | ((tl >= low) & (tl < low + osz))
        t = t.astype(jnp.float32)
        indr_f = indr.astype(jnp.float32)
        omask = (ocol < osz).astype(jnp.float32)

        # root logit for cluster j: cheap 128-lane select from resident roots
        sel = (lax.broadcasted_iota(jnp.int32, (tile_b, 128), 1) == j
               ).astype(jnp.float32)
        root = jnp.sum(roots_scr[...] * sel, axis=1, keepdims=True)   # (tile_b, 1)

        # weighted BCE on p = sigmoid(root) * sigmoid(zc), done in log space
        sp_nr = jnp.maximum(-root, 0.0) + jnp.log1p(jnp.exp(-jnp.abs(root)))
        sp_nz = jnp.maximum(-zc, 0.0) + jnp.log1p(jnp.exp(-jnp.abs(zc)))
        log_p = jnp.maximum(-sp_nr - sp_nz, -100.0)
        p = jnp.exp(log_p)
        log_1mp = jnp.maximum(jnp.log1p(-p), -100.0)
        elem = -(cpwj * t) * log_p - (1.0 - t) * log_1mp
        closs = jnp.sum(elem * omask, axis=1, keepdims=True) * indr_f
        acc_scr[...] = acc_scr[...] + closs

        # -------------------- finalize (last cluster) --------------------
        @pl.when(j == nc - 1)
        def _fin():
            per_row = acc_scr[...] / num_scr[...]            # exact divide
            row = lax.broadcasted_iota(jnp.int32, (tile_b, 1), 0) + i * tile_b
            valid = (row < B).astype(jnp.float32)            # drop padded rows
            tile_sum = jnp.sum(per_row * valid, axis=0, keepdims=True)   # (1, 1)
            out_ref[0] = jnp.broadcast_to(tile_sum, (1, 128))            # lane-dense

    common_specs = [
        pl.BlockSpec((tile_b, F_pad), lambda i, j, m: (i, 0)),    # x
        pl.BlockSpec((tile_b, L), lambda i, j, m: (i, 0)),        # targets
        pl.BlockSpec((F_pad, H_pad), lambda i, j, m: (0, 0)),     # head weight
        pl.BlockSpec((F_pad, 128), lambda i, j, m: (0, 0)),       # head root cols
        pl.BlockSpec((1, H_pad), lambda i, j, m: (0, 0)),         # head pos_weight
        pl.BlockSpec((1, 128), lambda i, j, m: (0, 0)),           # cluster low lane
        pl.BlockSpec((1, 128), lambda i, j, m: (0, 0)),           # cluster size lane
    ]
    if weights_resident:
        w_specs = [
            pl.BlockSpec((nc, F_pad, HSZ_pad), lambda i, j, m: (0, 0, 0)),
            pl.BlockSpec((nc, 1, HSZ_pad), lambda i, j, m: (0, 0, 0)),
            pl.BlockSpec((nc, 1, HSZ_pad), lambda i, j, m: (0, 0, 0)),
            pl.BlockSpec((nc, HSZ_pad, OSZ_pad), lambda i, j, m: (0, 0, 0)),
            pl.BlockSpec((nc, 1, OSZ_pad), lambda i, j, m: (0, 0, 0)),
        ]
    else:
        w_specs = [
            pl.BlockSpec((1, F_pad, HSZ_pad), lambda i, j, m: (j, 0, 0)),
            pl.BlockSpec((1, 1, HSZ_pad), lambda i, j, m: (j, 0, 0)),
            pl.BlockSpec((1, 1, HSZ_pad), lambda i, j, m: (j, 0, 0)),
            pl.BlockSpec((1, HSZ_pad, OSZ_pad), lambda i, j, m: (j, 0, 0)),
            pl.BlockSpec((1, 1, OSZ_pad), lambda i, j, m: (j, 0, 0)),
        ]

    grid_spec = pltpu.PrefetchScalarGridSpec(
        num_scalar_prefetch=1,
        grid=(nb, nc),
        in_specs=common_specs + w_specs,
        out_specs=pl.BlockSpec((1, 1, 128), lambda i, j, m: (i, 0, 0)),
        scratch_shapes=[
            pltpu.VMEM((tile_b, 1), jnp.float32),      # accumulated per-row loss
            pltpu.VMEM((tile_b, 1), jnp.float32),      # num_loss per row
            pltpu.VMEM((tile_b, 128), jnp.float32),    # resident root logits
        ],
    )

    per_tile = pl.pallas_call(
        kernel,
        out_shape=jax.ShapeDtypeStruct((nb, 1, 128), jnp.float32),
        grid_spec=grid_spec,
        compiler_params=pltpu.CompilerParams(
            dimension_semantics=("parallel", "arbitrary"),
            vmem_limit_bytes=vmem_limit,
        ),
    )(meta, xp, tgt, whp, whr, hpw, low_lane, size_lane, w1s, gms, bts, w2s, cpw)

    # per-tile partial sums -> batch mean (tiny scalar glue in plain JAX)
    return jnp.sum(per_tile[:, 0, 0]) / jnp.float32(B)


# ------------------------------ param init ---------------------------------

def init_params(key, in_features, n_classes, cutoffs, div_value=2.0):
    cutoffs_full = list(cutoffs) + [n_classes]
    shortlist = cutoffs_full[0]
    n_clusters = len(cutoffs_full) - 1
    head_size = shortlist + n_clusters
    keys = jax.random.split(key, 2 + 3 * n_clusters)

    scale = 1.0 / (in_features ** 0.5)
    w_head_t = jax.random.uniform(keys[0], (in_features, head_size), jnp.float32,
                                  -scale, scale)
    head_pw = jax.random.uniform(keys[1], (head_size,), jnp.float32, 0.5, 2.0)

    w1t, w2t, gamma, beta, cluster_pw, cluster_sizes = [], [], [], [], [], []
    for i in range(n_clusters):
        hsz = int(in_features // div_value ** (i + 1))
        osz = cutoffs_full[i + 1] - cutoffs_full[i]
        cluster_sizes.append(osz)
        k1, k2, k3 = keys[2 + 3 * i], keys[3 + 3 * i], keys[4 + 3 * i]
        w1t.append(jax.random.uniform(k1, (in_features, hsz), jnp.float32,
                                      -scale, scale))
        s2 = 1.0 / (hsz ** 0.5)
        w2t.append(jax.random.uniform(k2, (hsz, osz), jnp.float32, -s2, s2))
        gamma.append(jnp.ones((1, hsz), jnp.float32))    # torch LayerNorm defaults
        beta.append(jnp.zeros((1, hsz), jnp.float32))
        cluster_pw.append(jax.random.uniform(k3, (osz,), jnp.float32, 0.5, 2.0))

    params = dict(w_head_t=w_head_t, head_pw=head_pw, w1t=w1t, w2t=w2t,
                  gamma=gamma, beta=beta, cluster_pw=cluster_pw)
    cfg = dict(cutoffs=cutoffs_full, cluster_sizes=cluster_sizes)
    return params, cfg


# --------------------------------- main -------------------------------------

if __name__ == "__main__":
    in_features = 32
    n_classes = 80
    cutoffs = [16, 48]          # head: [0,16), cluster0: [16,48), cluster1: [48,80)
    B, L = 8, 4                 # batch, labels-per-example

    key = jax.random.PRNGKey(0)
    kp, kx, kt = jax.random.split(key, 3)
    params, cfg = init_params(kp, in_features, n_classes, cutoffs)

    x = jax.random.normal(kx, (B, in_features), jnp.float32)
    target = jax.random.randint(kt, (B, L), 0, n_classes)   # multi-label indices

    loss = adaptive_bce_with_logits_loss(x, target, params, cfg)
    loss = jax.block_until_ready(loss)
    assert bool(jnp.isfinite(loss)), "loss is not finite"
    print("KERNEL_OK")
</pallas_src>

<mosaic_0001>
module attributes {stable_mosaic.version = 11 : i64} {
  func.func @kernel(%arg0: i32, %arg1: i32, %arg2: memref<2x4xi32, #tpu.memory_space<smem>>, %arg3: memref<16x128xbf16, #tpu.memory_space<vmem>>, %arg4: memref<16x4xi32, #tpu.memory_space<vmem>>, %arg5: memref<128x128xbf16, #tpu.memory_space<vmem>>, %arg6: memref<128x128xbf16, #tpu.memory_space<vmem>>, %arg7: memref<1x128xf32, #tpu.memory_space<vmem>>, %arg8: memref<1x128xi32, #tpu.memory_space<vmem>>, %arg9: memref<1x128xi32, #tpu.memory_space<vmem>>, %arg10: memref<2x128x128xbf16, #tpu.memory_space<vmem>>, %arg11: memref<2x1x128xf32, #tpu.memory_space<vmem>>, %arg12: memref<2x1x128xf32, #tpu.memory_space<vmem>>, %arg13: memref<2x128x128xbf16, #tpu.memory_space<vmem>>, %arg14: memref<2x1x128xf32, #tpu.memory_space<vmem>>, %arg15: memref<1x1x128xf32, #tpu.memory_space<vmem>>, %arg16: memref<16x1xf32, #tpu.memory_space<vmem>>, %arg17: memref<16x1xf32, #tpu.memory_space<vmem>>, %arg18: memref<16x128xf32, #tpu.memory_space<vmem>>) attributes {dimension_semantics = [#tpu.dimension_semantics<parallel>, #tpu.dimension_semantics<arbitrary>], iteration_bounds = array<i64: 1, 2>, scalar_prefetch = 1 : i64, scratch_operands = 3 : i64, tpu.core_type = #tpu.core_type<tc>, window_params = [{transform_indices = @transform_0, window_bounds = array<i64: 16, 128>}, {transform_indices = @transform_1, window_bounds = array<i64: 16, 4>}, {pipeline_mode = #tpu.pipeline_mode<synchronous>, transform_indices = @transform_2, window_bounds = array<i64: 128, 128>}, {pipeline_mode = #tpu.pipeline_mode<synchronous>, transform_indices = @transform_3, window_bounds = array<i64: 128, 128>}, {pipeline_mode = #tpu.pipeline_mode<synchronous>, transform_indices = @transform_4, window_bounds = array<i64: 1, 128>}, {pipeline_mode = #tpu.pipeline_mode<synchronous>, transform_indices = @transform_5, window_bounds = array<i64: 1, 128>}, {pipeline_mode = #tpu.pipeline_mode<synchronous>, transform_indices = @transform_6, window_bounds = array<i64: 1, 128>}, {pipeline_mode = #tpu.pipeline_mode<synchronous>, transform_indices = @transform_7, window_bounds = array<i64: 2, 128, 128>}, {pipeline_mode = #tpu.pipeline_mode<synchronous>, transform_indices = @transform_8, window_bounds = array<i64: 2, 1, 128>}, {pipeline_mode = #tpu.pipeline_mode<synchronous>, transform_indices = @transform_9, window_bounds = array<i64: 2, 1, 128>}, {pipeline_mode = #tpu.pipeline_mode<synchronous>, transform_indices = @transform_10, window_bounds = array<i64: 2, 128, 128>}, {pipeline_mode = #tpu.pipeline_mode<synchronous>, transform_indices = @transform_11, window_bounds = array<i64: 2, 1, 128>}, {transform_indices = @transform_12, window_bounds = array<i64: 1, 1, 128>}]} {
    %c0 = arith.constant 0 : index
    %c0_0 = arith.constant 0 : index
    %0 = vector.load %arg3[%c0, %c0_0] : memref<16x128xbf16, #tpu.memory_space<vmem>>, vector<16x128xbf16>
    %c0_1 = arith.constant 0 : index
    %c0_2 = arith.constant 0 : index
    %1 = vector.load %arg4[%c0_1, %c0_2] : memref<16x4xi32, #tpu.memory_space<vmem>>, vector<16x4xi32>
    %c0_i32 = arith.constant 0 : i32
    %2 = arith.cmpi eq, %arg1, %c0_i32 : i32
    %3 = arith.extui %2 : i1 to i32
    %c0_i32_3 = arith.constant 0 : i32
    %4 = arith.cmpi ne, %3, %c0_i32_3 : i32
    scf.if %4 {
      %c0_42 = arith.constant 0 : index
      %c0_43 = arith.constant 0 : index
      %177 = vector.load %arg5[%c0_42, %c0_43] : memref<128x128xbf16, #tpu.memory_space<vmem>>, vector<128x128xbf16>
      %cst_44 = arith.constant dense<0.000000e+00> : vector<16x128xf32>
      %178 = tpu.matmul %0, %177, %cst_44 {dimension_numbers = #tpu.dot_dimension_numbers<[1], [0], [0], [1], [0, 0, 1, 1], [], []>} : vector<16x128xbf16>, vector<128x128xbf16>, vector<16x128xf32> -> vector<16x128xf32>
      %c0_45 = arith.constant 0 : index
      %c0_46 = arith.constant 0 : index
      %179 = vector.load %arg6[%c0_45, %c0_46] : memref<128x128xbf16, #tpu.memory_space<vmem>>, vector<128x128xbf16>
      %cst_47 = arith.constant dense<0.000000e+00> : vector<16x128xf32>
      %180 = tpu.matmul %0, %179, %cst_47 {dimension_numbers = #tpu.dot_dimension_numbers<[1], [0], [0], [1], [0, 0, 1, 1], [], []>} : vector<16x128xbf16>, vector<128x128xbf16>, vector<16x128xf32> -> vector<16x128xf32>
      %c0_48 = arith.constant 0 : index
      %c0_49 = arith.constant 0 : index
      %181 = vector.load %arg18[%c0_48, %c0_49] : memref<16x128xf32, #tpu.memory_space<vmem>>, vector<16x128xf32>
      tpu.vector_store %arg18[%c0_48, %c0_49], %180 {strides = array<i32>} : memref<16x128xf32, #tpu.memory_space<vmem>>, vector<16x128xf32>,
      %182 = tpu.iota {dimensions = array<i32: 1>} : vector<16x128xi32>
      %183 = vector.extract_strided_slice %1 {offsets = [0, 0], sizes = [16, 1], strides = [1, 1]} : vector<16x4xi32> to vector<16x1xi32>
      %184 = vector.broadcast %183 : vector<16x1xi32> to vector<16x128xi32>
      %185 = arith.cmpi eq, %182, %184 : vector<16x128xi32>
      %186 = vector.extract_strided_slice %1 {offsets = [0, 1], sizes = [16, 1], strides = [1, 1]} : vector<16x4xi32> to vector<16x1xi32>
      %187 = vector.broadcast %186 : vector<16x1xi32> to vector<16x128xi32>
      %188 = arith.cmpi eq, %182, %187 : vector<16x128xi32>
      %189 = arith.ori %185, %188 : vector<16x128xi1>
      %190 = vector.extract_strided_slice %1 {offsets = [0, 2], sizes = [16, 1], strides = [1, 1]} : vector<16x4xi32> to vector<16x1xi32>
      %191 = vector.broadcast %190 : vector<16x1xi32> to vector<16x128xi32>
      %192 = arith.cmpi eq, %182, %191 : vector<16x128xi32>
      %193 = arith.ori %189, %192 : vector<16x128xi1>
      %194 = vector.extract_strided_slice %1 {offsets = [0, 3], sizes = [16, 1], strides = [1, 1]} : vector<16x4xi32> to vector<16x1xi32>
      %195 = vector.broadcast %194 : vector<16x1xi32> to vector<16x128xi32>
      %196 = arith.cmpi eq, %182, %195 : vector<16x128xi32>
      %197 = arith.ori %193, %196 : vector<16x128xi1>
      %c16_i32 = arith.constant 16 : i32
      %198 = vector.broadcast %c16_i32 : i32 to vector<16x128xi32>
      %199 = arith.cmpi slt, %182, %198 : vector<16x128xi32>
      %200 = arith.andi %197, %199 : vector<16x128xi1>
      %201 = arith.extui %200 : vector<16x128xi1> to vector<16x128xi32>
      %202 = arith.sitofp %201 : vector<16x128xi32> to vector<16x128xf32>
      %203 = arith.extui %199 : vector<16x128xi1> to vector<16x128xi32>
      %204 = arith.sitofp %203 : vector<16x128xi32> to vector<16x128xf32>
      %205 = math.absf %178 : vector<16x128xf32>
      %cst_50 = arith.constant 0.000000e+00 : f32
      %206 = vector.broadcast %cst_50 : f32 to vector<16x128xf32>
      %207 = arith.subf %206, %205 : vector<16x128xf32>
      %208 = math.exp %207 : vector<16x128xf32>
      %209 = math.log1p %208 : vector<16x128xf32>
      %cst_51 = arith.constant 0.000000e+00 : f32
      %210 = vector.broadcast %cst_51 : f32 to vector<16x128xf32>
      %211 = arith.subf %210, %178 : vector<16x128xf32>
      %cst_52 = arith.constant 0.000000e+00 : f32
      %212 = vector.broadcast %cst_52 : f32 to vector<16x128xf32>
      %213 = arith.maximumf %211, %212 : vector<16x128xf32>
      %214 = arith.addf %213, %209 : vector<16x128xf32>
      %cst_53 = arith.constant 0.000000e+00 : f32
      %215 = vector.broadcast %cst_53 : f32 to vector<16x128xf32>
      %216 = arith.maximumf %178, %215 : vector<16x128xf32>
      %217 = arith.addf %216, %209 : vector<16x128xf32>
      %c0_54 = arith.constant 0 : index
      %c0_55 = arith.constant 0 : index
      %218 = vector.load %arg7[%c0_54, %c0_55] : memref<1x128xf32, #tpu.memory_space<vmem>>, vector<1x128xf32>
      %219 = vector.broadcast %218 : vector<1x128xf32> to vector<16x128xf32>
      %220 = arith.mulf %219, %202 : vector<16x128xf32>
      %221 = arith.mulf %220, %214 : vector<16x128xf32>
      %cst_56 = arith.constant 1.000000e+00 : f32
      %222 = vector.broadcast %cst_56 : f32 to vector<16x128xf32>
      %223 = arith.subf %222, %202 : vector<16x128xf32>
      %224 = arith.mulf %223, %217 : vector<16x128xf32>
      %225 = arith.addf %221, %224 : vector<16x128xf32>
      %226 = arith.mulf %225, %204 : vector<16x128xf32>
      %cst_57 = arith.constant dense<0.000000e+00> : vector<16xf32>
      %227 = vector.multi_reduction <add>, %226, %cst_57 [1] : vector<16x128xf32> to vector<16xf32>
      %228 = vector.shape_cast %227 : vector<16xf32> to vector<16x1xf32>
      %c0_58 = arith.constant 0 : index
      %c0_59 = arith.constant 0 : index
      %229 = vector.load %arg8[%c0_58, %c0_59] : memref<1x128xi32, #tpu.memory_space<vmem>>, vector<1x128xi32>
      %c0_60 = arith.constant 0 : index
      %c0_61 = arith.constant 0 : index
      %230 = vector.load %arg9[%c0_60, %c0_61] : memref<1x128xi32, #tpu.memory_space<vmem>>, vector<1x128xi32>
      %231 = arith.addi %229, %230 : vector<1x128xi32>
      %232 = vector.extract_strided_slice %1 {offsets = [0, 0], sizes = [16, 1], strides = [1, 1]} : vector<16x4xi32> to vector<16x1xi32>
      %233 = vector.broadcast %232 : vector<16x1xi32> to vector<16x128xi32>
      %234 = vector.broadcast %229 : vector<1x128xi32> to vector<16x128xi32>
      %235 = arith.cmpi sge, %233, %234 : vector<16x128xi32>
      %236 = vector.extract_strided_slice %1 {offsets = [0, 0], sizes = [16, 1], strides = [1, 1]} : vector<16x4xi32> to vector<16x1xi32>
      %237 = vector.broadcast %236 : vector<16x1xi32> to vector<16x128xi32>
      %238 = vector.broadcast %231 : vector<1x128xi32> to vector<16x128xi32>
      %239 = arith.cmpi slt, %237, %238 : vector<16x128xi32>
      %240 = arith.andi %235, %239 : vector<16x128xi1>
      %241 = vector.extract_strided_slice %1 {offsets = [0, 1], sizes = [16, 1], strides = [1, 1]} : vector<16x4xi32> to vector<16x1xi32>
      %242 = vector.broadcast %241 : vector<16x1xi32> to vector<16x128xi32>
      %243 = vector.broadcast %229 : vector<1x128xi32> to vector<16x128xi32>
      %244 = arith.cmpi sge, %242, %243 : vector<16x128xi32>
      %245 = vector.broadcast %241 : vector<16x1xi32> to vector<16x128xi32>
      %246 = vector.broadcast %231 : vector<1x128xi32> to vector<16x128xi32>
      %247 = arith.cmpi slt, %245, %246 : vector<16x128xi32>
      %248 = arith.andi %244, %247 : vector<16x128xi1>
      %249 = arith.ori %240, %248 : vector<16x128xi1>
      %250 = vector.extract_strided_slice %1 {offsets = [0, 2], sizes = [16, 1], strides = [1, 1]} : vector<16x4xi32> to vector<16x1xi32>
      %251 = vector.broadcast %250 : vector<16x1xi32> to vector<16x128xi32>
      %252 = vector.broadcast %229 : vector<1x128xi32> to vector<16x128xi32>
      %253 = arith.cmpi sge, %251, %252 : vector<16x128xi32>
      %254 = vector.broadcast %250 : vector<16x1xi32> to vector<16x128xi32>
      %255 = vector.broadcast %231 : vector<1x128xi32> to vector<16x128xi32>
      %256 = arith.cmpi slt, %254, %255 : vector<16x128xi32>
      %257 = arith.andi %253, %256 : vector<16x128xi1>
      %258 = arith.ori %249, %257 : vector<16x128xi1>
      %259 = vector.extract_strided_slice %1 {offsets = [0, 3], sizes = [16, 1], strides = [1, 1]} : vector<16x4xi32> to vector<16x1xi32>
      %260 = vector.broadcast %259 : vector<16x1xi32> to vector<16x128xi32>
      %261 = vector.broadcast %229 : vector<1x128xi32> to vector<16x128xi32>
      %262 = arith.cmpi sge, %260, %261 : vector<16x128xi32>
      %263 = vector.broadcast %259 : vector<16x1xi32> to vector<16x128xi32>
      %264 = vector.broadcast %231 : vector<1x128xi32> to vector<16x128xi32>
      %265 = arith.cmpi slt, %263, %264 : vector<16x128xi32>
      %266 = arith.andi %262, %265 : vector<16x128xi1>
      %267 = arith.ori %258, %266 : vector<16x128xi1>
      %268 = arith.extui %267 : vector<16x128xi1> to vector<16x128xi32>
      %269 = arith.sitofp %268 : vector<16x128xi32> to vector<16x128xf32>
      %270 = tpu.iota {dimensions = array<i32: 1>} : vector<1x128xi32>
      %c2_i32 = arith.constant 2 : i32
      %271 = vector.broadcast %c2_i32 : i32 to vector<1x128xi32>
      %272 = arith.cmpi slt, %270, %271 : vector<1x128xi32>
      %273 = arith.extui %272 : vector<1x128xi1> to vector<1x128xi32>
      %274 = arith.sitofp %273 : vector<1x128xi32> to vector<1x128xf32>
      %cst_62 = arith.constant 0.000000e+00 : f32
      %275 = vector.broadcast %cst_62 : f32 to vector<16x128xf32>
      %276 = arith.maximumf %180, %275 : vector<16x128xf32>
      %277 = math.absf %180 : vector<16x128xf32>
      %cst_63 = arith.constant 0.000000e+00 : f32
      %278 = vector.broadcast %cst_63 : f32 to vector<16x128xf32>
      %279 = arith.subf %278, %277 : vector<16x128xf32>
      %280 = math.exp %279 : vector<16x128xf32>
      %281 = math.log1p %280 : vector<16x128xf32>
      %282 = arith.addf %276, %281 : vector<16x128xf32>
      %cst_64 = arith.constant 1.000000e+00 : f32
      %283 = vector.broadcast %cst_64 : f32 to vector<16x128xf32>
      %284 = arith.subf %283, %269 : vector<16x128xf32>
      %285 = vector.broadcast %274 : vector<1x128xf32> to vector<16x128xf32>
      %286 = arith.mulf %285, %284 : vector<16x128xf32>
      %287 = arith.mulf %286, %282 : vector<16x128xf32>
      %cst_65 = arith.constant dense<0.000000e+00> : vector<16xf32>
      %288 = vector.multi_reduction <add>, %287, %cst_65 [1] : vector<16x128xf32> to vector<16xf32>
      %289 = vector.shape_cast %288 : vector<16xf32> to vector<16x1xf32>
      %290 = arith.sitofp %230 : vector<1x128xi32> to vector<1x128xf32>
      %cst_66 = arith.constant 1.000000e+00 : f32
      %291 = vector.broadcast %cst_66 : f32 to vector<16x128xf32>
      %292 = arith.subf %291, %269 : vector<16x128xf32>
      %293 = vector.broadcast %290 : vector<1x128xf32> to vector<16x128xf32>
      %294 = arith.mulf %269, %293 : vector<16x128xf32>
      %295 = arith.addf %292, %294 : vector<16x128xf32>
      %296 = vector.broadcast %274 : vector<1x128xf32> to vector<16x128xf32>
      %297 = arith.mulf %296, %295 : vector<16x128xf32>
      %cst_67 = arith.constant dense<0.000000e+00> : vector<16xf32>
      %298 = vector.multi_reduction <add>, %297, %cst_67 [1] : vector<16x128xf32> to vector<16xf32>
      %299 = vector.shape_cast %298 : vector<16xf32> to vector<16x1xf32>
      %cst_68 = arith.constant 1.600000e+01 : f32
      %300 = vector.broadcast %cst_68 : f32 to vector<16x1xf32>
      %301 = arith.addf %300, %299 : vector<16x1xf32>
      %302 = arith.addf %228, %289 : vector<16x1xf32>
      %c0_69 = arith.constant 0 : index
      %c0_70 = arith.constant 0 : index
      %303 = vector.load %arg16[%c0_69, %c0_70] : memref<16x1xf32, #tpu.memory_space<vmem>>, vector<16x1xf32>
      tpu.vector_store %arg16[%c0_69, %c0_70], %302 {strides = array<i32>} : memref<16x1xf32, #tpu.memory_space<vmem>>, vector<16x1xf32>,
      %c0_71 = arith.constant 0 : index
      %c0_72 = arith.constant 0 : index
      %304 = vector.load %arg17[%c0_71, %c0_72] : memref<16x1xf32, #tpu.memory_space<vmem>>, vector<16x1xf32>
      tpu.vector_store %arg17[%c0_71, %c0_72], %301 {strides = array<i32>} : memref<16x1xf32, #tpu.memory_space<vmem>>, vector<16x1xf32>,
    } else {
    }
    %5 = arith.index_cast %arg1 : i32 to index
    %c0_4 = arith.constant 0 : index
    %6 = memref.load %arg2[%5, %c0_4] : memref<2x4xi32, #tpu.memory_space<smem>>
    %7 = arith.index_cast %arg1 : i32 to index
    %c1 = arith.constant 1 : index
    %8 = memref.load %arg2[%7, %c1] : memref<2x4xi32, #tpu.memory_space<smem>>
    %9 = arith.index_cast %arg1 : i32 to index
    %c2 = arith.constant 2 : index
    %10 = memref.load %arg2[%9, %c2] : memref<2x4xi32, #tpu.memory_space<smem>>
    %11 = arith.index_cast %arg1 : i32 to index
    %c0_5 = arith.constant 0 : index
    %c0_6 = arith.constant 0 : index
    %12 = vector.load %arg10[%11, %c0_5, %c0_6] : memref<2x128x128xbf16, #tpu.memory_space<vmem>>, vector<1x128x128xbf16>
    %13 = vector.shape_cast %12 : vector<1x128x128xbf16> to vector<128x128xbf16>
    %14 = arith.index_cast %arg1 : i32 to index
    %c0_7 = arith.constant 0 : index
    %c0_8 = arith.constant 0 : index
    %15 = vector.load %arg11[%14, %c0_7, %c0_8] : memref<2x1x128xf32, #tpu.memory_space<vmem>>, vector<1x1x128xf32>
    %16 = vector.shape_cast %15 : vector<1x1x128xf32> to vector<1x128xf32>
    %17 = arith.index_cast %arg1 : i32 to index
    %c0_9 = arith.constant 0 : index
    %c0_10 = arith.constant 0 : index
    %18 = vector.load %arg12[%17, %c0_9, %c0_10] : memref<2x1x128xf32, #tpu.memory_space<vmem>>, vector<1x1x128xf32>
    %19 = vector.shape_cast %18 : vector<1x1x128xf32> to vector<1x128xf32>
    %20 = arith.index_cast %arg1 : i32 to index
    %c0_11 = arith.constant 0 : index
    %c0_12 = arith.constant 0 : index
    %21 = vector.load %arg13[%20, %c0_11, %c0_12] : memref<2x128x128xbf16, #tpu.memory_space<vmem>>, vector<1x128x128xbf16>
    %22 = vector.shape_cast %21 : vector<1x128x128xbf16> to vector<128x128xbf16>
    %23 = arith.index_cast %arg1 : i32 to index
    %c0_13 = arith.constant 0 : index
    %c0_14 = arith.constant 0 : index
    %24 = vector.load %arg14[%23, %c0_13, %c0_14] : memref<2x1x128xf32, #tpu.memory_space<vmem>>, vector<1x1x128xf32>
    %25 = vector.shape_cast %24 : vector<1x1x128xf32> to vector<1x128xf32>
    %cst = arith.constant dense<0.000000e+00> : vector<16x128xf32>
    %26 = tpu.matmul %0, %13, %cst {dimension_numbers = #tpu.dot_dimension_numbers<[1], [0], [0], [1], [0, 0, 1, 1], [], []>} : vector<16x128xbf16>, vector<128x128xbf16>, vector<16x128xf32> -> vector<16x128xf32>
    %27 = tpu.iota {dimensions = array<i32: 1>} : vector<16x128xi32>
    %28 = vector.broadcast %10 : i32 to vector<16x128xi32>
    %29 = arith.cmpi slt, %27, %28 : vector<16x128xi32>
    %30 = arith.extui %29 : vector<16x128xi1> to vector<16x128xi32>
    %31 = arith.sitofp %30 : vector<16x128xi32> to vector<16x128xf32>
    %32 = arith.sitofp %10 : i32 to f32
    %cst_15 = arith.constant 1.000000e+00 : f32
    %33 = arith.divf %cst_15, %32 : f32
    %34 = arith.mulf %26, %31 : vector<16x128xf32>
    %cst_16 = arith.constant dense<0.000000e+00> : vector<16xf32>
    %35 = vector.multi_reduction <add>, %34, %cst_16 [1] : vector<16x128xf32> to vector<16xf32>
    %36 = vector.shape_cast %35 : vector<16xf32> to vector<16x1xf32>
    %37 = vector.broadcast %33 : f32 to vector<16x1xf32>
    %38 = arith.mulf %36, %37 : vector<16x1xf32>
    %39 = vector.broadcast %38 : vector<16x1xf32> to vector<16x128xf32>
    %40 = arith.subf %26, %39 : vector<16x128xf32>
    %41 = arith.mulf %40, %31 : vector<16x128xf32>
    %42 = arith.mulf %41, %41 : vector<16x128xf32>
    %cst_17 = arith.constant dense<0.000000e+00> : vector<16xf32>
    %43 = vector.multi_reduction <add>, %42, %cst_17 [1] : vector<16x128xf32> to vector<16xf32>
    %44 = vector.shape_cast %43 : vector<16xf32> to vector<16x1xf32>
    %45 = vector.broadcast %33 : f32 to vector<16x1xf32>
    %46 = arith.mulf %44, %45 : vector<16x1xf32>
    %47 = vector.broadcast %38 : vector<16x1xf32> to vector<16x128xf32>
    %48 = arith.subf %26, %47 : vector<16x128xf32>
    %cst_18 = arith.constant 9.99999974E-6 : f32
    %49 = vector.broadcast %cst_18 : f32 to vector<16x1xf32>
    %50 = arith.addf %46, %49 : vector<16x1xf32>
    %51 = math.rsqrt %50 : vector<16x1xf32>
    %52 = vector.broadcast %51 : vector<16x1xf32> to vector<16x128xf32>
    %53 = arith.mulf %48, %52 : vector<16x128xf32>
    %54 = vector.broadcast %16 : vector<1x128xf32> to vector<16x128xf32>
    %55 = arith.mulf %53, %54 : vector<16x128xf32>
    %56 = vector.broadcast %19 : vector<1x128xf32> to vector<16x128xf32>
    %57 = arith.addf %55, %56 : vector<16x128xf32>
    %cst_19 = arith.constant 0.000000e+00 : f32
    %58 = vector.broadcast %cst_19 : f32 to vector<16x128xf32>
    %59 = arith.maximumf %57, %58 : vector<16x128xf32>
    %60 = arith.truncf %59 : vector<16x128xf32> to vector<16x128xbf16>
    %cst_20 = arith.constant dense<0.000000e+00> : vector<16x128xf32>
    %61 = tpu.matmul %60, %22, %cst_20 {dimension_numbers = #tpu.dot_dimension_numbers<[1], [0], [0], [1], [0, 0, 1, 1], [], []>} : vector<16x128xbf16>, vector<128x128xbf16>, vector<16x128xf32> -> vector<16x128xf32>
    %62 = tpu.iota {dimensions = array<i32: 1>} : vector<16x128xi32>
    %63 = vector.broadcast %6 : i32 to vector<16x128xi32>
    %64 = arith.addi %62, %63 : vector<16x128xi32>
    %65 = vector.extract_strided_slice %1 {offsets = [0, 0], sizes = [16, 1], strides = [1, 1]} : vector<16x4xi32> to vector<16x1xi32>
    %66 = vector.broadcast %65 : vector<16x1xi32> to vector<16x128xi32>
    %67 = arith.cmpi eq, %66, %64 : vector<16x128xi32>
    %68 = vector.extract_strided_slice %1 {offsets = [0, 0], sizes = [16, 1], strides = [1, 1]} : vector<16x4xi32> to vector<16x1xi32>
    %69 = vector.broadcast %6 : i32 to vector<16x1xi32>
    %70 = arith.cmpi sge, %68, %69 : vector<16x1xi32>
    %71 = vector.extract_strided_slice %1 {offsets = [0, 0], sizes = [16, 1], strides = [1, 1]} : vector<16x4xi32> to vector<16x1xi32>
    %72 = arith.addi %6, %8 : i32
    %73 = vector.broadcast %72 : i32 to vector<16x1xi32>
    %74 = arith.cmpi slt, %71, %73 : vector<16x1xi32>
    %75 = arith.andi %70, %74 : vector<16x1xi1>
    %76 = vector.extract_strided_slice %1 {offsets = [0, 1], sizes = [16, 1], strides = [1, 1]} : vector<16x4xi32> to vector<16x1xi32>
    %77 = vector.broadcast %76 : vector<16x1xi32> to vector<16x128xi32>
    %78 = arith.cmpi eq, %77, %64 : vector<16x128xi32>
    %79 = arith.ori %67, %78 : vector<16x128xi1>
    %80 = vector.broadcast %6 : i32 to vector<16x1xi32>
    %81 = arith.cmpi sge, %76, %80 : vector<16x1xi32>
    %82 = arith.addi %6, %8 : i32
    %83 = vector.broadcast %82 : i32 to vector<16x1xi32>
    %84 = arith.cmpi slt, %76, %83 : vector<16x1xi32>
    %85 = arith.andi %81, %84 : vector<16x1xi1>
    %86 = arith.ori %75, %85 : vector<16x1xi1>
    %87 = vector.extract_strided_slice %1 {offsets = [0, 2], sizes = [16, 1], strides = [1, 1]} : vector<16x4xi32> to vector<16x1xi32>
    %88 = vector.broadcast %87 : vector<16x1xi32> to vector<16x128xi32>
    %89 = arith.cmpi eq, %88, %64 : vector<16x128xi32>
    %90 = arith.ori %79, %89 : vector<16x128xi1>
    %91 = vector.broadcast %6 : i32 to vector<16x1xi32>
    %92 = arith.cmpi sge, %87, %91 : vector<16x1xi32>
    %93 = arith.addi %6, %8 : i32
    %94 = vector.broadcast %93 : i32 to vector<16x1xi32>
    %95 = arith.cmpi slt, %87, %94 : vector<16x1xi32>
    %96 = arith.andi %92, %95 : vector<16x1xi1>
    %97 = arith.ori %86, %96 : vector<16x1xi1>
    %98 = vector.extract_strided_slice %1 {offsets = [0, 3], sizes = [16, 1], strides = [1, 1]} : vector<16x4xi32> to vector<16x1xi32>
    %99 = vector.broadcast %98 : vector<16x1xi32> to vector<16x128xi32>
    %100 = arith.cmpi eq, %99, %64 : vector<16x128xi32>
    %101 = arith.ori %90, %100 : vector<16x128xi1>
    %102 = vector.broadcast %6 : i32 to vector<16x1xi32>
    %103 = arith.cmpi sge, %98, %102 : vector<16x1xi32>
    %104 = arith.addi %6, %8 : i32
    %105 = vector.broadcast %104 : i32 to vector<16x1xi32>
    %106 = arith.cmpi slt, %98, %105 : vector<16x1xi32>
    %107 = arith.andi %103, %106 : vector<16x1xi1>
    %108 = arith.ori %97, %107 : vector<16x1xi1>
    %109 = arith.extui %101 : vector<16x128xi1> to vector<16x128xi32>
    %110 = arith.sitofp %109 : vector<16x128xi32> to vector<16x128xf32>
    %111 = arith.extui %108 : vector<16x1xi1> to vector<16x1xi32>
    %112 = arith.sitofp %111 : vector<16x1xi32> to vector<16x1xf32>
    %113 = vector.broadcast %8 : i32 to vector<16x128xi32>
    %114 = arith.cmpi slt, %62, %113 : vector<16x128xi32>
    %115 = arith.extui %114 : vector<16x128xi1> to vector<16x128xi32>
    %116 = arith.sitofp %115 : vector<16x128xi32> to vector<16x128xf32>
    %117 = tpu.iota {dimensions = array<i32: 1>} : vector<16x128xi32>
    %118 = vector.broadcast %arg1 : i32 to vector<16x128xi32>
    %119 = arith.cmpi eq, %117, %118 : vector<16x128xi32>
    %120 = arith.extui %119 : vector<16x128xi1> to vector<16x128xi32>
    %121 = arith.sitofp %120 : vector<16x128xi32> to vector<16x128xf32>
    %c0_21 = arith.constant 0 : index
    %c0_22 = arith.constant 0 : index
    %122 = vector.load %arg18[%c0_21, %c0_22] : memref<16x128xf32, #tpu.memory_space<vmem>>, vector<16x128xf32>
    %123 = arith.mulf %122, %121 : vector<16x128xf32>
    %cst_23 = arith.constant dense<0.000000e+00> : vector<16xf32>
    %124 = vector.multi_reduction <add>, %123, %cst_23 [1] : vector<16x128xf32> to vector<16xf32>
    %125 = vector.shape_cast %124 : vector<16xf32> to vector<16x1xf32>
    %cst_24 = arith.constant 0.000000e+00 : f32
    %126 = vector.broadcast %cst_24 : f32 to vector<16x1xf32>
    %127 = arith.subf %126, %125 : vector<16x1xf32>
    %cst_25 = arith.constant 0.000000e+00 : f32
    %128 = vector.broadcast %cst_25 : f32 to vector<16x1xf32>
    %129 = arith.maximumf %127, %128 : vector<16x1xf32>
    %130 = math.absf %125 : vector<16x1xf32>
    %cst_26 = arith.constant 0.000000e+00 : f32
    %131 = vector.broadcast %cst_26 : f32 to vector<16x1xf32>
    %132 = arith.subf %131, %130 : vector<16x1xf32>
    %133 = math.exp %132 : vector<16x1xf32>
    %134 = math.log1p %133 : vector<16x1xf32>
    %135 = arith.addf %129, %134 : vector<16x1xf32>
    %cst_27 = arith.constant 0.000000e+00 : f32
    %136 = vector.broadcast %cst_27 : f32 to vector<16x128xf32>
    %137 = arith.subf %136, %61 : vector<16x128xf32>
    %cst_28 = arith.constant 0.000000e+00 : f32
    %138 = vector.broadcast %cst_28 : f32 to vector<16x128xf32>
    %139 = arith.maximumf %137, %138 : vector<16x128xf32>
    %140 = math.absf %61 : vector<16x128xf32>
    %cst_29 = arith.constant 0.000000e+00 : f32
    %141 = vector.broadcast %cst_29 : f32 to vector<16x128xf32>
    %142 = arith.subf %141, %140 : vector<16x128xf32>
    %143 = math.exp %142 : vector<16x128xf32>
    %144 = math.log1p %143 : vector<16x128xf32>
    %145 = arith.addf %139, %144 : vector<16x128xf32>
    %cst_30 = arith.constant 0.000000e+00 : f32
    %146 = vector.broadcast %cst_30 : f32 to vector<16x1xf32>
    %147 = arith.subf %146, %135 : vector<16x1xf32>
    %148 = vector.broadcast %147 : vector<16x1xf32> to vector<16x128xf32>
    %149 = arith.subf %148, %145 : vector<16x128xf32>
    %cst_31 = arith.constant -1.000000e+02 : f32
    %150 = vector.broadcast %cst_31 : f32 to vector<16x128xf32>
    %151 = arith.maximumf %149, %150 : vector<16x128xf32>
    %152 = math.exp %151 : vector<16x128xf32>
    %cst_32 = arith.constant 0.000000e+00 : f32
    %153 = vector.broadcast %cst_32 : f32 to vector<16x128xf32>
    %154 = arith.subf %153, %152 : vector<16x128xf32>
    %155 = math.log1p %154 : vector<16x128xf32>
    %cst_33 = arith.constant -1.000000e+02 : f32
    %156 = vector.broadcast %cst_33 : f32 to vector<16x128xf32>
    %157 = arith.maximumf %155, %156 : vector<16x128xf32>
    %158 = vector.broadcast %25 : vector<1x128xf32> to vector<16x128xf32>
    %159 = arith.mulf %158, %110 : vector<16x128xf32>
    %cst_34 = arith.constant 0.000000e+00 : f32
    %160 = vector.broadcast %cst_34 : f32 to vector<16x128xf32>
    %161 = arith.subf %160, %159 : vector<16x128xf32>
    %162 = arith.mulf %161, %151 : vector<16x128xf32>
    %cst_35 = arith.constant 1.000000e+00 : f32
    %163 = vector.broadcast %cst_35 : f32 to vector<16x128xf32>
    %164 = arith.subf %163, %110 : vector<16x128xf32>
    %165 = arith.mulf %164, %157 : vector<16x128xf32>
    %166 = arith.subf %162, %165 : vector<16x128xf32>
    %167 = arith.mulf %166, %116 : vector<16x128xf32>
    %cst_36 = arith.constant dense<0.000000e+00> : vector<16xf32>
    %168 = vector.multi_reduction <add>, %167, %cst_36 [1] : vector<16x128xf32> to vector<16xf32>
    %169 = vector.shape_cast %168 : vector<16xf32> to vector<16x1xf32>
    %170 = arith.mulf %169, %112 : vector<16x1xf32>
    %c0_37 = arith.constant 0 : index
    %c0_38 = arith.constant 0 : index
    %171 = vector.load %arg16[%c0_37, %c0_38] : memref<16x1xf32, #tpu.memory_space<vmem>>, vector<16x1xf32>
    %172 = arith.addf %171, %170 : vector<16x1xf32>
    %c0_39 = arith.constant 0 : index
    %c0_40 = arith.constant 0 : index
    %173 = vector.load %arg16[%c0_39, %c0_40] : memref<16x1xf32, #tpu.memory_space<vmem>>, vector<16x1xf32>
    tpu.vector_store %arg16[%c0_39, %c0_40], %172 {strides = array<i32>} : memref<16x1xf32, #tpu.memory_space<vmem>>, vector<16x1xf32>,
    %c1_i32 = arith.constant 1 : i32
    %174 = arith.cmpi eq, %arg1, %c1_i32 : i32
    %175 = arith.extui %174 : i1 to i32
    %c0_i32_41 = arith.constant 0 : i32
    %176 = arith.cmpi ne, %175, %c0_i32_41 : i32
    scf.if %176 {
      %c0_42 = arith.constant 0 : index
      %c0_43 = arith.constant 0 : index
      %177 = vector.load %arg16[%c0_42, %c0_43] : memref<16x1xf32, #tpu.memory_space<vmem>>, vector<16x1xf32>
      %c0_44 = arith.constant 0 : index
      %c0_45 = arith.constant 0 : index
      %178 = vector.load %arg17[%c0_44, %c0_45] : memref<16x1xf32, #tpu.memory_space<vmem>>, vector<16x1xf32>
      %179 = arith.divf %177, %178 : vector<16x1xf32>
      %180 = tpu.iota {dimensions = array<i32: 0>} : vector<16x1xi32>
      %c16_i32 = arith.constant 16 : i32
      %181 = arith.muli %arg0, %c16_i32 : i32
      %182 = vector.broadcast %181 : i32 to vector<16x1xi32>
      %183 = arith.addi %180, %182 : vector<16x1xi32>
      %c8_i32 = arith.constant 8 : i32
      %184 = vector.broadcast %c8_i32 : i32 to vector<16x1xi32>
      %185 = arith.cmpi slt, %183, %184 : vector<16x1xi32>
      %186 = arith.extui %185 : vector<16x1xi1> to vector<16x1xi32>
      %187 = arith.sitofp %186 : vector<16x1xi32> to vector<16x1xf32>
      %188 = arith.mulf %179, %187 : vector<16x1xf32>
      %cst_46 = arith.constant dense<0.000000e+00> : vector<1xf32>
      %189 = vector.multi_reduction <add>, %188, %cst_46 [0] : vector<16x1xf32> to vector<1xf32>
      %190 = vector.shape_cast %189 : vector<1xf32> to vector<1x1xf32>
      %191 = vector.shape_cast %190 : vector<1x1xf32> to vector<1x1xf32>
      %192 = vector.broadcast %191 : vector<1x1xf32> to vector<1x128xf32>
      %c0_47 = arith.constant 0 : index
      %c0_48 = arith.constant 0 : index
      %c0_49 = arith.constant 0 : index
      %193 = vector.load %arg15[%c0_47, %c0_48, %c0_49] : memref<1x1x128xf32, #tpu.memory_space<vmem>>, vector<1x1x128xf32>
      %194 = vector.shape_cast %193 : vector<1x1x128xf32> to vector<1x128xf32>
      %195 = vector.shape_cast %192 : vector<1x128xf32> to vector<1x1x128xf32>
      tpu.vector_store %arg15[%c0_47, %c0_48, %c0_49], %195 {strides = array<i32>} : memref<1x1x128xf32, #tpu.memory_space<vmem>>, vector<1x1x128xf32>,
    } else {
    }
    return
  }
  func.func @transform_0(%arg0: i32, %arg1: i32, %arg2: memref<2x4xi32, #tpu.memory_space<smem>>) -> (i32, i32) {
    %c0_i32 = arith.constant 0 : i32
    %c0_i32_0 = arith.constant 0 : i32
    return %arg0, %c0_i32 : i32, i32
  }
  func.func @transform_1(%arg0: i32, %arg1: i32, %arg2: memref<2x4xi32, #tpu.memory_space<smem>>) -> (i32, i32) {
    %c0_i32 = arith.constant 0 : i32
    %c0_i32_0 = arith.constant 0 : i32
    return %arg0, %c0_i32 : i32, i32
  }
  func.func @transform_2(%arg0: i32, %arg1: i32, %arg2: memref<2x4xi32, #tpu.memory_space<smem>>) -> (i32, i32) {
    %c0_i32 = arith.constant 0 : i32
    %c0_i32_0 = arith.constant 0 : i32
    %c0_i32_1 = arith.constant 0 : i32
    return %c0_i32, %c0_i32_0 : i32, i32
  }
  func.func @transform_3(%arg0: i32, %arg1: i32, %arg2: memref<2x4xi32, #tpu.memory_space<smem>>) -> (i32, i32) {
    %c0_i32 = arith.constant 0 : i32
    %c0_i32_0 = arith.constant 0 : i32
    %c0_i32_1 = arith.constant 0 : i32
    return %c0_i32, %c0_i32_0 : i32, i32
  }
  func.func @transform_4(%arg0: i32, %arg1: i32, %arg2: memref<2x4xi32, #tpu.memory_space<smem>>) -> (i32, i32) {
    %c0_i32 = arith.constant 0 : i32
    %c0_i32_0 = arith.constant 0 : i32
    %c0_i32_1 = arith.constant 0 : i32
    return %c0_i32, %c0_i32_0 : i32, i32
  }
  func.func @transform_5(%arg0: i32, %arg1: i32, %arg2: memref<2x4xi32, #tpu.memory_space<smem>>) -> (i32, i32) {
    %c0_i32 = arith.constant 0 : i32
    %c0_i32_0 = arith.constant 0 : i32
    %c0_i32_1 = arith.constant 0 : i32
    return %c0_i32, %c0_i32_0 : i32, i32
  }
  func.func @transform_6(%arg0: i32, %arg1: i32, %arg2: memref<2x4xi32, #tpu.memory_space<smem>>) -> (i32, i32) {
    %c0_i32 = arith.constant 0 : i32
    %c0_i32_0 = arith.constant 0 : i32
    %c0_i32_1 = arith.constant 0 : i32
    return %c0_i32, %c0_i32_0 : i32, i32
  }
  func.func @transform_7(%arg0: i32, %arg1: i32, %arg2: memref<2x4xi32, #tpu.memory_space<smem>>) -> (i32, i32, i32) {
    %c0_i32 = arith.constant 0 : i32
    %c0_i32_0 = arith.constant 0 : i32
    %c0_i32_1 = arith.constant 0 : i32
    %c0_i32_2 = arith.constant 0 : i32
    return %c0_i32, %c0_i32_0, %c0_i32_1 : i32, i32, i32
  }
  func.func @transform_8(%arg0: i32, %arg1: i32, %arg2: memref<2x4xi32, #tpu.memory_space<smem>>) -> (i32, i32, i32) {
    %c0_i32 = arith.constant 0 : i32
    %c0_i32_0 = arith.constant 0 : i32
    %c0_i32_1 = arith.constant 0 : i32
    %c0_i32_2 = arith.constant 0 : i32
    return %c0_i32, %c0_i32_0, %c0_i32_1 : i32, i32, i32
  }
  func.func @transform_9(%arg0: i32, %arg1: i32, %arg2: memref<2x4xi32, #tpu.memory_space<smem>>) -> (i32, i32, i32) {
    %c0_i32 = arith.constant 0 : i32
    %c0_i32_0 = arith.constant 0 : i32
    %c0_i32_1 = arith.constant 0 : i32
    %c0_i32_2 = arith.constant 0 : i32
    return %c0_i32, %c0_i32_0, %c0_i32_1 : i32, i32, i32
  }
  func.func @transform_10(%arg0: i32, %arg1: i32, %arg2: memref<2x4xi32, #tpu.memory_space<smem>>) -> (i32, i32, i32) {
    %c0_i32 = arith.constant 0 : i32
    %c0_i32_0 = arith.constant 0 : i32
    %c0_i32_1 = arith.constant 0 : i32
    %c0_i32_2 = arith.constant 0 : i32
    return %c0_i32, %c0_i32_0, %c0_i32_1 : i32, i32, i32
  }
  func.func @transform_11(%arg0: i32, %arg1: i32, %arg2: memref<2x4xi32, #tpu.memory_space<smem>>) -> (i32, i32, i32) {
    %c0_i32 = arith.constant 0 : i32
    %c0_i32_0 = arith.constant 0 : i32
    %c0_i32_1 = arith.constant 0 : i32
    %c0_i32_2 = arith.constant 0 : i32
    return %c0_i32, %c0_i32_0, %c0_i32_1 : i32, i32, i32
  }
  func.func @transform_12(%arg0: i32, %arg1: i32, %arg2: memref<2x4xi32, #tpu.memory_space<smem>>) -> (i32, i32, i32) {
    %c0_i32 = arith.constant 0 : i32
    %c0_i32_0 = arith.constant 0 : i32
    %c0_i32_1 = arith.constant 0 : i32
    return %arg0, %c0_i32, %c0_i32_0 : i32, i32, i32
  }
}

</mosaic_0001>

<llo_original>
// kernel: tpu_custom_call.1
$region0: #{tpu_custom_call.1}
  #allocation0 [shape = 'u32[]', space=smem, size = 0x4, offset = 0x4, fixed_abs, tag = 'smem constant byte address 0x4 - core index']
  #allocation1 [shape = 'u32[144,128]{1,0:T(1,128)}', space=vmem, size = 0x12000, scoped, tag = 'internal scratch']
  #allocation2 [shape = 'f32[16,1]{1,0:T(8,128)}', space=vmem, size = 0x2000, scoped, tag = 'scratch operand']
  #allocation3 [shape = 'f32[16,1]{1,0:T(8,128)}', space=vmem, size = 0x2000, scoped, tag = 'scratch operand']
  #allocation4 [shape = 'f32[16,128]{1,0:T(8,128)}', space=vmem, size = 0x2000, scoped, tag = 'scratch operand']
  #allocation5 [shape = 's32[1]{0}', space=sflag, size = 0x4, scoped, tag = 'scoped memory for tpu_custom_call.1']
  #allocation6 [shape = 'u8[1024]{0}', space=smem, size = 0x400, scoped, tag = 'prefetched SMEM operand 0']
  %s0 = inlined_call_operand.vmem [shape: s32[2,4], index: 0, kind: input, shape index: {}]
  %s1 = inlined_call_operand.vmem [shape: bf16[16,128], index: 1, kind: input, shape index: {}]
  %s2 = inlined_call_operand.vmem [shape: s32[16,4], index: 2, kind: input, shape index: {}]
  %s3 = inlined_call_operand.hbm [shape: bf16[128,128], index: 3, kind: input, shape index: {}]
  %s4 = inlined_call_operand.hbm [shape: bf16[128,128], index: 4, kind: input, shape index: {}]
  %s5 = inlined_call_operand.vmem [shape: f32[1,128], index: 5, kind: input, shape index: {}]
  %s6 = inlined_call_operand.vmem [shape: s32[1,128], index: 6, kind: input, shape index: {}]
  %s7 = inlined_call_operand.vmem [shape: s32[1,128], index: 7, kind: input, shape index: {}]
  %s8 = inlined_call_operand.hbm [shape: bf16[2,128,128], index: 8, kind: input, shape index: {}]
  %s9 = inlined_call_operand.vmem [shape: f32[2,1,128], index: 9, kind: input, shape index: {}]
  %s10 = inlined_call_operand.vmem [shape: f32[2,1,128], index: 10, kind: input, shape index: {}]
  %s11 = inlined_call_operand.hbm [shape: bf16[2,128,128], index: 11, kind: input, shape index: {}]
  %s12 = inlined_call_operand.vmem [shape: f32[2,1,128], index: 12, kind: input, shape index: {}]
  %s13 = inlined_call_operand.hbm [shape: f32[1,1,128], index: 13, kind: output, shape index: {}]
  %s14 = sld [smem:[#allocation0]]
  $region105: #{tpu_custom_call.1} parent=0
    _
  %s16 = ssub.s32 1, %s14
  %s17 = scalar_select 0, %s16, %s14
  %s18 = sshll.u32 %s0, 4
  %s19 = int_to_ptr.vmem [resolvable:$true] %s18
  %21 = dma.vmem_to_smem %s19, 32, [#allocation6], [#allocation5]
  %22 = dma.done [#allocation5], 32
  %23 = sfence
  $region1: #{tpu_custom_call.1} parent=0
    #allocation7 [shape = 'u8[32768]{0}', space=vmem, size = 0x8000, scoped, tag = 'input window, operand 3, single buffered']
    #allocation8 [shape = 's32[2]{0}', space=sflag, size = 0x8, scoped, tag = 'scoped memory for tpu_custom_call.1']
    #allocation9 [shape = 's32[2]{0}', space=sflag, size = 0x8, scoped, tag = 'scoped memory for tpu_custom_call.1']
    #allocation10 [shape = 'u8[32768]{0}', space=vmem, size = 0x8000, scoped, tag = 'input window, operand 4, single buffered']
    #allocation11 [shape = 's32[1]{0}', space=sflag, size = 0x4, scoped, tag = 'scoped memory for tpu_custom_call.1']
    #allocation12 [shape = 'u8[65536]{0}', space=vmem, size = 0x10000, scoped, tag = 'input window, operand 8, single buffered']
    #allocation13 [shape = 'u8[65536]{0}', space=vmem, size = 0x10000, scoped, tag = 'input window, operand 11, single buffered']
    #allocation14 [shape = 's32[1]{0}', space=sflag, size = 0x4, scoped, tag = 'scoped memory for tpu_custom_call.1']
    #allocation15 [shape = 'u8[512]{0}', space=vmem, size = 0x400, scoped, tag = 'output window, operand 0, single buffered']
    %24 = vsyncpa [#allocation8], 0
    %25 = vsyncpa [#allocation11], 0
    %26 = vsyncpa [#allocation14], 0
    %27 = vsyncpa [#allocation9], 0
    loop: start=0, step=1, limit=4
    $region2: #{tpu_custom_call.1} parent=1 // loop_pre_header
      _
    $region3: #{tpu_custom_call.1} parent=1 // loop_header
      %s29 = sphi 0, %s33
      %p30 = scmp.ge.s32.totalorder %s29, 4
      %s36 = sphi 0, %s48
      %s37 = sphi 0, %s44
      %s38 = sphi 0, %s36
      %s39 = sphi 0, %s37
      %s40 = sphi 0, %s38
      %s41 = sphi 0, %s39
      %s51 = sphi 0, %s53
      %s54 = sphi 0, %s51
      %s55 = sphi 0, %s54
      %s71 = sphi 0, %s55
      %s77 = sphi 0, %s79
      %s80 = sphi 0, %s77
      %s81 = sphi 0, %s80
      %s97 = sphi 0, %s81
      %s101 = sphi 0, %s101
      %s103 = sphi 0, %s101
      %s104 = sphi 0, %s103
      %s118 = sphi 0, %s104
      %s122 = sphi 0, %s122
      %s124 = sphi 0, %s122
      %s125 = sphi 0, %s124
      %s139 = sphi 0, %s125
      %s143 = sphi 0, %s143
      %s145 = sphi 0, %s143
      %s146 = sphi 0, %s145
      %s160 = sphi 0, %s146
      %s164 = sphi 0, %s164
      %s166 = sphi 0, %s164
      %s167 = sphi 0, %s166
      %s181 = sphi 0, %s167
      %s185 = sphi 0, %s185
      %s187 = sphi 0, %s185
      %s188 = sphi 0, %s187
      %s202 = sphi 0, %s188
      %s206 = sphi 0, %s206
      %s208 = sphi 0, %s206
      %s209 = sphi 0, %s208
      %s223 = sphi 0, %s209
      %s227 = sphi 0, %s227
      %s229 = sphi 0, %s227
      %s230 = sphi 0, %s229
      %s244 = sphi 0, %s230
      %s248 = sphi 0, %s248
      %s250 = sphi 0, %s248
      %s251 = sphi 0, %s250
      %s265 = sphi 0, %s251
      %s269 = sphi 0, %s269
      %s271 = sphi 0, %s269
      %s272 = sphi 0, %s271
      %s286 = sphi 0, %s272
      %s290 = sphi 0, %s290
      %s292 = sphi 0, %s290
      %s293 = sphi 0, %s292
      %s307 = sphi 0, %s293
      %s313 = sphi 0, %s315
      %s316 = sphi 0, %s313
      %s317 = sphi 0, %s316
      %s333 = sphi 0, %s317
    $region4: #{tpu_custom_call.1} parent=1 // loop_header_branch
      %32 = sbr.rel (%p30) target = $region8
    $region5: #{tpu_custom_call.1} parent=1 // loop_body
      %s34 = ssub.s32 %s29, 1
      %s35 = ssub.s32 %s29, 2
      %s42 = sadd.s32 1, %s37
      %p43 = scmp.ge.s32.totalorder %s42, 2
      %s44 = scalar_select %p43, 0, %s42
      %s45 = sadd.s32 1, %s36
      %s46 = scalar_select %p43, %s45, %s36
      %p47 = scmp.ge.s32.totalorder %s46, 1
      %s48 = scalar_select %p47, 0, %s46
      %s49 = ssub.s32 %s36, %s48
      %p50 = scmp.eq.s32.totalorder %s49, 0
      %s52 = sadd.s32 %s51, 1
      %s53 = scalar_select %p50, %s51, %s52
      %p56 = pneg %p50
      %p57 = scmp.eq.s32.totalorder %s29, 1
      %p58 = por %p56, %p57
      %p59 = scmp.ne.s32.totalorder %s51, %s54
      %p60 = scmp.eq.s32.totalorder %s29, 0
      %p61 = por %p59, %p60
      %p62 = scmp.ne.s32.totalorder %s51, %s54
      %p63 = scmp.eq.s32.totalorder %s34, 1
      %p64 = por %p62, %p63
      %p65 = scmp.ne.s32.totalorder %s54, %s55
      %p66 = scmp.eq.s32.totalorder %s34, 0
      %p67 = por %p65, %p66
      %p68 = scmp.ne.s32.totalorder %s54, %s55
      %p69 = scmp.eq.s32.totalorder %s35, 1
      %p70 = por %p68, %p69
      %p72 = scmp.ne.s32.totalorder %s55, %s71
      %p73 = scmp.eq.s32.totalorder %s35, 0
      %p74 = por %p72, %p73
      %s75 = ssub.s32 %s36, %s48
      %p76 = scmp.eq.s32.totalorder %s75, 0
      %s78 = sadd.s32 %s77, 1
      %s79 = scalar_select %p76, %s77, %s78
      %p82 = pneg %p76
      %p83 = scmp.eq.s32.totalorder %s29, 1
      %p84 = por %p82, %p83
      %p85 = scmp.ne.s32.totalorder %s77, %s80
      %p86 = scmp.eq.s32.totalorder %s29, 0
      %p87 = por %p85, %p86
      %p88 = scmp.ne.s32.totalorder %s77, %s80
      %p89 = scmp.eq.s32.totalorder %s34, 1
      %p90 = por %p88, %p89
      %p91 = scmp.ne.s32.totalorder %s80, %s81
      %p92 = scmp.eq.s32.totalorder %s34, 0
      %p93 = por %p91, %p92
      %p94 = scmp.ne.s32.totalorder %s80, %s81
      %p95 = scmp.eq.s32.totalorder %s35, 1
      %p96 = por %p94, %p95
      %p98 = scmp.ne.s32.totalorder %s81, %s97
      %p99 = scmp.eq.s32.totalorder %s35, 0
      %p100 = por %p98, %p99
      %s102 = sadd.s32 %s101, 1
      %p105 = scmp.eq.s32.totalorder %s29, 1
      %p106 = scmp.ne.s32.totalorder %s101, %s103
      %p107 = scmp.eq.s32.totalorder %s29, 0
      %p108 = por %p106, %p107
      %p109 = scmp.ne.s32.totalorder %s101, %s103
      %p110 = scmp.eq.s32.totalorder %s34, 1
      %p111 = por %p109, %p110
      %p112 = scmp.ne.s32.totalorder %s103, %s104
      %p113 = scmp.eq.s32.totalorder %s34, 0
      %p114 = por %p112, %p113
      %p115 = scmp.ne.s32.totalorder %s103, %s104
      %p116 = scmp.eq.s32.totalorder %s35, 1
      %p117 = por %p115, %p116
      %p119 = scmp.ne.s32.totalorder %s104, %s118
      %p120 = scmp.eq.s32.totalorder %s35, 0
      %p121 = por %p119, %p120
      %s123 = sadd.s32 %s122, 1
      %p126 = scmp.eq.s32.totalorder %s29, 1
      %p127 = scmp.ne.s32.totalorder %s122, %s124
      %p128 = scmp.eq.s32.totalorder %s29, 0
      %p129 = por %p127, %p128
      %p130 = scmp.ne.s32.totalorder %s122, %s124
      %p131 = scmp.eq.s32.totalorder %s34, 1
      %p132 = por %p130, %p131
      %p133 = scmp.ne.s32.totalorder %s124, %s125
      %p134 = scmp.eq.s32.totalorder %s34, 0
      %p135 = por %p133, %p134
      %p136 = scmp.ne.s32.totalorder %s124, %s125
      %p137 = scmp.eq.s32.totalorder %s35, 1
      %p138 = por %p136, %p137
      %p140 = scmp.ne.s32.totalorder %s125, %s139
      %p141 = scmp.eq.s32.totalorder %s35, 0
      %p142 = por %p140, %p141
      %s144 = sadd.s32 %s143, 1
      %p147 = scmp.eq.s32.totalorder %s29, 1
      %p148 = scmp.ne.s32.totalorder %s143, %s145
      %p149 = scmp.eq.s32.totalorder %s29, 0
      %p150 = por %p148, %p149
      %p151 = scmp.ne.s32.totalorder %s143, %s145
      %p152 = scmp.eq.s32.totalorder %s34, 1
      %p153 = por %p151, %p152
      %p154 = scmp.ne.s32.totalorder %s145, %s146
      %p155 = scmp.eq.s32.totalorder %s34, 0
      %p156 = por %p154, %p155
      %p157 = scmp.ne.s32.totalorder %s145, %s146
      %p158 = scmp.eq.s32.totalorder %s35, 1
      %p159 = por %p157, %p158
      %p161 = scmp.ne.s32.totalorder %s146, %s160
      %p162 = scmp.eq.s32.totalorder %s35, 0
      %p163 = por %p161, %p162
      %s165 = sadd.s32 %s164, 1
      %p168 = scmp.eq.s32.totalorder %s29, 1
      %p169 = scmp.ne.s32.totalorder %s164, %s166
      %p170 = scmp.eq.s32.totalorder %s29, 0
      %p171 = por %p169, %p170
      %p172 = scmp.ne.s32.totalorder %s164, %s166
      %p173 = scmp.eq.s32.totalorder %s34, 1
      %p174 = por %p172, %p173
      %p175 = scmp.ne.s32.totalorder %s166, %s167
      %p176 = scmp.eq.s32.totalorder %s34, 0
      %p177 = por %p175, %p176
      %p178 = scmp.ne.s32.totalorder %s166, %s167
      %p179 = scmp.eq.s32.totalorder %s35, 1
      %p180 = por %p178, %p179
      %p182 = scmp.ne.s32.totalorder %s167, %s181
      %p183 = scmp.eq.s32.totalorder %s35, 0
      %p184 = por %p182, %p183
      %s186 = sadd.s32 %s185, 1
      %p189 = scmp.eq.s32.totalorder %s29, 1
      %p190 = scmp.ne.s32.totalorder %s185, %s187
      %p191 = scmp.eq.s32.totalorder %s29, 0
      %p192 = por %p190, %p191
      %p193 = scmp.ne.s32.totalorder %s185, %s187
      %p194 = scmp.eq.s32.totalorder %s34, 1
      %p195 = por %p193, %p194
      %p196 = scmp.ne.s32.totalorder %s187, %s188
      %p197 = scmp.eq.s32.totalorder %s34, 0
      %p198 = por %p196, %p197
      %p199 = scmp.ne.s32.totalorder %s187, %s188
      %p200 = scmp.eq.s32.totalorder %s35, 1
      %p201 = por %p199, %p200
      %p203 = scmp.ne.s32.totalorder %s188, %s202
      %p204 = scmp.eq.s32.totalorder %s35, 0
      %p205 = por %p203, %p204
      %s207 = sadd.s32 %s206, 1
      %p210 = scmp.eq.s32.totalorder %s29, 1
      %p211 = scmp.ne.s32.totalorder %s206, %s208
      %p212 = scmp.eq.s32.totalorder %s29, 0
      %p213 = por %p211, %p212
      %p214 = scmp.ne.s32.totalorder %s206, %s208
      %p215 = scmp.eq.s32.totalorder %s34, 1
      %p216 = por %p214, %p215
      %p217 = scmp.ne.s32.totalorder %s208, %s209
      %p218 = scmp.eq.s32.totalorder %s34, 0
      %p219 = por %p217, %p218
      %p220 = scmp.ne.s32.totalorder %s208, %s209
      %p221 = scmp.eq.s32.totalorder %s35, 1
      %p222 = por %p220, %p221
      %p224 = scmp.ne.s32.totalorder %s209, %s223
      %p225 = scmp.eq.s32.totalorder %s35, 0
      %p226 = por %p224, %p225
      %s228 = sadd.s32 %s227, 1
      %p231 = scmp.eq.s32.totalorder %s29, 1
      %p232 = scmp.ne.s32.totalorder %s227, %s229
      %p233 = scmp.eq.s32.totalorder %s29, 0
      %p234 = por %p232, %p233
      %p235 = scmp.ne.s32.totalorder %s227, %s229
      %p236 = scmp.eq.s32.totalorder %s34, 1
      %p237 = por %p235, %p236
      %p238 = scmp.ne.s32.totalorder %s229, %s230
      %p239 = scmp.eq.s32.totalorder %s34, 0
      %p240 = por %p238, %p239
      %p241 = scmp.ne.s32.totalorder %s229, %s230
      %p242 = scmp.eq.s32.totalorder %s35, 1
      %p243 = por %p241, %p242
      %p245 = scmp.ne.s32.totalorder %s230, %s244
      %p246 = scmp.eq.s32.totalorder %s35, 0
      %p247 = por %p245, %p246
      %s249 = sadd.s32 %s248, 1
      %p252 = scmp.eq.s32.totalorder %s29, 1
      %p253 = scmp.ne.s32.totalorder %s248, %s250
      %p254 = scmp.eq.s32.totalorder %s29, 0
      %p255 = por %p253, %p254
      %p256 = scmp.ne.s32.totalorder %s248, %s250
      %p257 = scmp.eq.s32.totalorder %s34, 1
      %p258 = por %p256, %p257
      %p259 = scmp.ne.s32.totalorder %s250, %s251
      %p260 = scmp.eq.s32.totalorder %s34, 0
      %p261 = por %p259, %p260
      %p262 = scmp.ne.s32.totalorder %s250, %s251
      %p263 = scmp.eq.s32.totalorder %s35, 1
      %p264 = por %p262, %p263
      %p266 = scmp.ne.s32.totalorder %s251, %s265
      %p267 = scmp.eq.s32.totalorder %s35, 0
      %p268 = por %p266, %p267
      %s270 = sadd.s32 %s269, 1
      %p273 = scmp.eq.s32.totalorder %s29, 1
      %p274 = scmp.ne.s32.totalorder %s269, %s271
      %p275 = scmp.eq.s32.totalorder %s29, 0
      %p276 = por %p274, %p275
      %p277 = scmp.ne.s32.totalorder %s269, %s271
      %p278 = scmp.eq.s32.totalorder %s34, 1
      %p279 = por %p277, %p278
      %p280 = scmp.ne.s32.totalorder %s271, %s272
      %p281 = scmp.eq.s32.totalorder %s34, 0
      %p282 = por %p280, %p281
      %p283 = scmp.ne.s32.totalorder %s271, %s272
      %p284 = scmp.eq.s32.totalorder %s35, 1
      %p285 = por %p283, %p284
      %p287 = scmp.ne.s32.totalorder %s272, %s286
      %p288 = scmp.eq.s32.totalorder %s35, 0
      %p289 = por %p287, %p288
      %s291 = sadd.s32 %s290, 1
      %p294 = scmp.eq.s32.totalorder %s29, 1
      %p295 = scmp.ne.s32.totalorder %s290, %s292
      %p296 = scmp.eq.s32.totalorder %s29, 0
      %p297 = por %p295, %p296
      %p298 = scmp.ne.s32.totalorder %s290, %s292
      %p299 = scmp.eq.s32.totalorder %s34, 1
      %p300 = por %p298, %p299
      %p301 = scmp.ne.s32.totalorder %s292, %s293
      %p302 = scmp.eq.s32.totalorder %s34, 0
      %p303 = por %p301, %p302
      %p304 = scmp.ne.s32.totalorder %s292, %s293
      %p305 = scmp.eq.s32.totalorder %s35, 1
      %p306 = por %p304, %p305
      %p308 = scmp.ne.s32.totalorder %s293, %s307
      %p309 = scmp.eq.s32.totalorder %s35, 0
      %p310 = por %p308, %p309
      %s311 = ssub.s32 %s36, %s48
      %p312 = scmp.eq.s32.totalorder %s311, 0
      %s314 = sadd.s32 %s313, 1
      %s315 = scalar_select %p312, %s313, %s314
      %p318 = pneg %p312
      %p319 = scmp.eq.s32.totalorder %s29, 1
      %p320 = por %p318, %p319
      %p321 = scmp.ne.s32.totalorder %s313, %s316
      %p322 = scmp.eq.s32.totalorder %s29, 0
      %p323 = por %p321, %p322
      %p324 = scmp.ne.s32.totalorder %s313, %s316
      %p325 = scmp.eq.s32.totalorder %s34, 1
      %p326 = por %p324, %p325
      %p327 = scmp.ne.s32.totalorder %s316, %s317
      %p328 = scmp.eq.s32.totalorder %s34, 0
      %p329 = por %p327, %p328
      %p330 = scmp.ne.s32.totalorder %s316, %s317
      %p331 = scmp.eq.s32.totalorder %s35, 1
      %p332 = por %p330, %p331
      %p334 = scmp.ne.s32.totalorder %s317, %s333
      %p335 = scmp.eq.s32.totalorder %s35, 0
      %p336 = por %p334, %p335
      %p337 = scmp.le.s32.totalorder 1, %s29
      %p338 = scmp.lt.s32.totalorder %s29, 3
      %p339 = pnand %p337, %p338
      %p340 = pneg %p339
      // Predicated region
      $region9: #{tpu_custom_call.1} parent=5 // pred_check
        _
      $region10: #{tpu_custom_call.1} parent=5 // pred_check_branch
        %342 = sbr.rel (%p339) target = $region12
      $region11: #{tpu_custom_call.1} parent=5 // pred_region
        %s343 = ssub.s32 %s29, 1
        // Predicated region
        $region13: #{tpu_custom_call.1} parent=11 // pred_check
          %p344 = pneg %p67
        $region14: #{tpu_custom_call.1} parent=11 // pred_check_branch
          %346 = sbr.rel (%p344) target = $region16
        $region15: #{tpu_custom_call.1} parent=11 // pred_region
          %s347 = smul.u32 2, %s38
          %p348 = scmp.lt.s32.totalorder %s347, 1
          %s349 = scalar_select %p348, %s347, 1
          %s350 = smul.addr %s349, 4
          %s351 = scalar_lea.vmem %s1, %s350
          %s352 = smul.u32 2, %s38
        $region16: #{tpu_custom_call.1} parent=11 // pred_fallthru
          _
        // Predicated region
        $region17: #{tpu_custom_call.1} parent=11 // pred_check
          %p353 = pneg %p93
        $region18: #{tpu_custom_call.1} parent=11 // pred_check_branch
          %355 = sbr.rel (%p353) target = $region20
        $region19: #{tpu_custom_call.1} parent=11 // pred_region
          %s356 = smul.u32 2, %s38
          %p357 = scmp.lt.s32.totalorder %s356, 1
          %s358 = scalar_select %p357, %s356, 1
          %s359 = smul.addr %s358, 8
          %s360 = scalar_lea.vmem %s2, %s359
          %s361 = smul.u32 2, %s38
        $region20: #{tpu_custom_call.1} parent=11 // pred_fallthru
          _
        // Predicated region
        $region21: #{tpu_custom_call.1} parent=11 // pred_check
          %p362 = pneg %p114
        $region22: #{tpu_custom_call.1} parent=11 // pred_check_branch
          %364 = sbr.rel (%p362) target = $region24
        $region23: #{tpu_custom_call.1} parent=11 // pred_region
          %s366 = ssub.s32 1024, 1024
          %367 = vsyncadd [#allocation8], %s366
          %s368 = sshll.u32 [#allocation7], 4
          %s369 = int_to_ptr.vmem [resolvable:$true] %s368
          %374 = dma.hbm_to_vmem [thread:$0]  %s3, 1024, %s369, [#allocation8], 64, 64, 4
        $region24: #{tpu_custom_call.1} parent=11 // pred_fallthru
          _
        // Predicated region
        $region25: #{tpu_custom_call.1} parent=11 // pred_check
          %p375 = pneg %p135
        $region26: #{tpu_custom_call.1} parent=11 // pred_check_branch
          %377 = sbr.rel (%p375) target = $region28
        $region27: #{tpu_custom_call.1} parent=11 // pred_region
          %s379 = ssub.s32 1024, 1024
          %380 = vsyncadd [#allocation11], %s379
          %s381 = sshll.u32 [#allocation10], 4
          %s382 = int_to_ptr.vmem [resolvable:$true] %s381
          %387 = dma.hbm_to_vmem [thread:$0]  %s4, 1024, %s382, [#allocation11], 64, 64, 4
        $region28: #{tpu_custom_call.1} parent=11 // pred_fallthru
          _
        // Predicated region
        $region29: #{tpu_custom_call.1} parent=11 // pred_check
          %p388 = pneg %p156
        $region30: #{tpu_custom_call.1} parent=11 // pred_check_branch
          %390 = sbr.rel (%p388) target = $region32
        $region31: #{tpu_custom_call.1} parent=11 // pred_region
          _
        $region32: #{tpu_custom_call.1} parent=11 // pred_fallthru
          _
        // Predicated region
        $region33: #{tpu_custom_call.1} parent=11 // pred_check
          %p391 = pneg %p177
        $region34: #{tpu_custom_call.1} parent=11 // pred_check_branch
          %393 = sbr.rel (%p391) target = $region36
        $region35: #{tpu_custom_call.1} parent=11 // pred_region
          _
        $region36: #{tpu_custom_call.1} parent=11 // pred_fallthru
          _
        // Predicated region
        $region37: #{tpu_custom_call.1} parent=11 // pred_check
          %p394 = pneg %p198
        $region38: #{tpu_custom_call.1} parent=11 // pred_check_branch
          %396 = sbr.rel (%p394) target = $region40
        $region39: #{tpu_custom_call.1} parent=11 // pred_region
          _
        $region40: #{tpu_custom_call.1} parent=11 // pred_fallthru
          _
        // Predicated region
        $region41: #{tpu_custom_call.1} parent=11 // pred_check
          %p397 = pneg %p219
        $region42: #{tpu_custom_call.1} parent=11 // pred_check_branch
          %399 = sbr.rel (%p397) target = $region44
        $region43: #{tpu_custom_call.1} parent=11 // pred_region
          %s401 = ssub.s32 2048, 2048
          %402 = vsyncadd [#allocation11], %s401
          %s403 = sshll.u32 [#allocation12], 4
          %s404 = int_to_ptr.vmem [resolvable:$true] %s403
          %409 = dma.hbm_to_vmem [thread:$0]  %s8, 2048, %s404, [#allocation11], 64, 64, 4
        $region44: #{tpu_custom_call.1} parent=11 // pred_fallthru
          _
        // Predicated region
        $region45: #{tpu_custom_call.1} parent=11 // pred_check
          %p410 = pneg %p240
        $region46: #{tpu_custom_call.1} parent=11 // pred_check_branch
          %412 = sbr.rel (%p410) target = $region48
        $region47: #{tpu_custom_call.1} parent=11 // pred_region
          _
        $region48: #{tpu_custom_call.1} parent=11 // pred_fallthru
          _
        // Predicated region
        $region49: #{tpu_custom_call.1} parent=11 // pred_check
          %p413 = pneg %p261
        $region50: #{tpu_custom_call.1} parent=11 // pred_check_branch
          %415 = sbr.rel (%p413) target = $region52
        $region51: #{tpu_custom_call.1} parent=11 // pred_region
          _
        $region52: #{tpu_custom_call.1} parent=11 // pred_fallthru
          _
        // Predicated region
        $region53: #{tpu_custom_call.1} parent=11 // pred_check
          %p416 = pneg %p282
        $region54: #{tpu_custom_call.1} parent=11 // pred_check_branch
          %418 = sbr.rel (%p416) target = $region56
        $region55: #{tpu_custom_call.1} parent=11 // pred_region
          %s420 = ssub.s32 2048, 2048
          %421 = vsyncadd [#allocation14], %s420
          %s422 = sshll.u32 [#allocation13], 4
          %s423 = int_to_ptr.vmem [resolvable:$true] %s422
          %428 = dma.hbm_to_vmem [thread:$0]  %s11, 2048, %s423, [#allocation14], 64, 64, 4
        $region56: #{tpu_custom_call.1} parent=11 // pred_fallthru
          _
        // Predicated region
        $region57: #{tpu_custom_call.1} parent=11 // pred_check
          %p429 = pneg %p303
        $region58: #{tpu_custom_call.1} parent=11 // pred_check_branch
          %431 = sbr.rel (%p429) target = $region60
        $region59: #{tpu_custom_call.1} parent=11 // pred_region
          _
        $region60: #{tpu_custom_call.1} parent=11 // pred_fallthru
          _
      $region12: #{tpu_custom_call.1} parent=5 // pred_fallthru
        _
      %p432 = scmp.lt.s32.totalorder %s29, 2
      // Predicated region
      $region61: #{tpu_custom_call.1} parent=5 // pred_check
        %p433 = pneg %p432
      $region62: #{tpu_custom_call.1} parent=5 // pred_check_branch
        %435 = sbr.rel (%p433) target = $region64
      $region63: #{tpu_custom_call.1} parent=5 // pred_region
        _
      $region64: #{tpu_custom_call.1} parent=5 // pred_fallthru
        _
      %p436 = scmp.le.s32.totalorder 1, %s29
      %p437 = scmp.lt.s32.totalorder %s29, 3
      %p438 = pnand %p436, %p437
      %p439 = pneg %p438
      // Predicated region
      $region65: #{tpu_custom_call.1} parent=5 // pred_check
        _
      $region66: #{tpu_custom_call.1} parent=5 // pred_check_branch
        %441 = sbr.rel (%p438) target = $region68
      $region67: #{tpu_custom_call.1} parent=5 // pred_region
        %s442 = ssub.s32 %s29, 1
        // Predicated region
        $region69: #{tpu_custom_call.1} parent=67 // pred_check
          %p443 = pneg %p114
        $region70: #{tpu_custom_call.1} parent=67 // pred_check_branch
          %445 = sbr.rel (%p443) target = $region72
        $region71: #{tpu_custom_call.1} parent=67 // pred_region
          %446 = dma.done [#allocation8], 1024
        $region72: #{tpu_custom_call.1} parent=67 // pred_fallthru
          _
        // Predicated region
        $region73: #{tpu_custom_call.1} parent=67 // pred_check
          %p447 = pneg %p135
        $region74: #{tpu_custom_call.1} parent=67 // pred_check_branch
          %449 = sbr.rel (%p447) target = $region76
        $region75: #{tpu_custom_call.1} parent=67 // pred_region
          %450 = dma.done [#allocation11], 1024
        $region76: #{tpu_custom_call.1} parent=67 // pred_fallthru
          _
        // Predicated region
        $region77: #{tpu_custom_call.1} parent=67 // pred_check
          %p451 = pneg %p219
        $region78: #{tpu_custom_call.1} parent=67 // pred_check_branch
          %453 = sbr.rel (%p451) target = $region80
        $region79: #{tpu_custom_call.1} parent=67 // pred_region
          %454 = dma.done [#allocation11], 2048
        $region80: #{tpu_custom_call.1} parent=67 // pred_fallthru
          _
        // Predicated region
        $region81: #{tpu_custom_call.1} parent=67 // pred_check
          %p455 = pneg %p282
        $region82: #{tpu_custom_call.1} parent=67 // pred_check_branch
          %457 = sbr.rel (%p455) target = $region84
        $region83: #{tpu_custom_call.1} parent=67 // pred_region
          %458 = dma.done [#allocation14], 2048
        $region84: #{tpu_custom_call.1} parent=67 // pred_fallthru
          _
        %s459 = smul.u32 2, %s38
        %p460 = scmp.lt.s32.totalorder %s459, 1
        %s461 = scalar_select %p460, %s459, 1
        %s462 = smul.addr %s461, 4
        %s463 = scalar_lea.vmem %s1, %s462
        %p464 = pneg %p67
        %p465 = pneg %p64
        %s466 = smul.u32 2, %s38
        %p467 = scmp.lt.s32.totalorder %s466, 1
        %s468 = scalar_select %p467, %s466, 1
        %s469 = smul.addr %s468, 8
        %s470 = scalar_lea.vmem %s2, %s469
        %p471 = pneg %p93
        %p472 = pneg %p90
        %p473 = pneg %p114
        %p474 = pneg %p111
        %p475 = pneg %p135
        %p476 = pneg %p132
        %p477 = pneg %p156
        %p478 = pneg %p153
        %p479 = pneg %p177
        %p480 = pneg %p174
        %p481 = pneg %p198
        %p482 = pneg %p195
        %p483 = pneg %p219
        %p484 = pneg %p216
        %p485 = pneg %p240
        %p486 = pneg %p237
        %p487 = pneg %p261
        %p488 = pneg %p258
        %p489 = pneg %p282
        %p490 = pneg %p279
        %p491 = pneg %p303
        %p492 = pneg %p300
        %p493 = pneg %p329
        %p494 = pneg %p326
        %s495 = smul.u32 2, %s38
        %p496 = scmp.lt.s32.totalorder %s495, 1
        %s497 = scalar_select %p496, %s495, 1
        %s498 = smul.addr %s497, 4
        %s499 = scalar_lea.vmem %s1, %s498
        %s500 = smul.u32 2, %s38
        %s501 = smul.u32 2, %s38
        %p502 = scmp.lt.s32.totalorder %s501, 1
        %s503 = scalar_select %p502, %s501, 1
        %s504 = smul.addr %s503, 8
        %s505 = scalar_lea.vmem %s2, %s504
        %s506 = smul.u32 2, %s38
        %v508 = vld [vmem:[%s499] sm:$0xf]
        %v509 = vld [vmem:[%s499 + $0x4] sm:$0xf]
        %v510 = vld [vmem:[%s505] sm:$0xff]
        %v511 = vld [vmem:[%s505 + $0x8] sm:$0xff]
        %p512 = scmp.eq.s32.totalorder %s39, 0
        // Predicated region
        $region85: #{tpu_custom_call.1} parent=67 // pred_check
          %p513 = pneg %p512
        $region86: #{tpu_custom_call.1} parent=67 // pred_check_branch
          %515 = sbr.rel (%p513) target = $region88
        $region87: #{tpu_custom_call.1} parent=67 // pred_region
          %v516 = vld [vmem:[#allocation7] sm:$0xf]
          %v517 = vld [vmem:[#allocation7 + $0x4] sm:$0xf]
          %v518 = vld [vmem:[#allocation7 + $0x8] sm:$0xf]
          %v519 = vld [vmem:[#allocation7 + $0xc] sm:$0xf]
          %v520 = vld [vmem:[#allocation7 + $0x10] sm:$0xf]
          %v521 = vld [vmem:[#allocation7 + $0x14] sm:$0xf]
          %v522 = vld [vmem:[#allocation7 + $0x18] sm:$0xf]
          %v523 = vld [vmem:[#allocation7 + $0x1c] sm:$0xf]
          %v524 = vld [vmem:[#allocation7 + $0x20] sm:$0xf]
          %v525 = vld [vmem:[#allocation7 + $0x24] sm:$0xf]
          %v526 = vld [vmem:[#allocation7 + $0x28] sm:$0xf]
          %v527 = vld [vmem:[#allocation7 + $0x2c] sm:$0xf]
          %v528 = vld [vmem:[#allocation7 + $0x30] sm:$0xf]
          %v529 = vld [vmem:[#allocation7 + $0x34] sm:$0xf]
          %v530 = vld [vmem:[#allocation7 + $0x38] sm:$0xf]
          %v531 = vld [vmem:[#allocation7 + $0x3c] sm:$0xf]
          %v534 = vunpack.c.l.b16 %v508
          %v535 = vunpack.c.l.b16 %v509
          %v536 = vpack.c.b16 %v535, %v534
          %v554 = vunpack.c.l.b16 %v516
          %v555 = vunpack.c.l.b16 %v517
          %v556 = vunpack.c.l.b16 %v518
          %v557 = vunpack.c.l.b16 %v519
          %v558 = vunpack.c.l.b16 %v520
          %v559 = vunpack.c.l.b16 %v521
          %v560 = vunpack.c.l.b16 %v522
          %v561 = vunpack.c.l.b16 %v523
          %v562 = vunpack.c.l.b16 %v524
          %v563 = vunpack.c.l.b16 %v525
          %v564 = vunpack.c.l.b16 %v526
          %v565 = vunpack.c.l.b16 %v527
          %v566 = vunpack.c.l.b16 %v528
          %v567 = vunpack.c.l.b16 %v529
          %v568 = vunpack.c.l.b16 %v530
          %v569 = vunpack.c.l.b16 %v531
          %v570 = vpack.c.b16 %v555, %v554
          %v571 = vpack.c.b16 %v557, %v556
          %v572 = vpack.c.b16 %v559, %v558
          %v573 = vpack.c.b16 %v561, %v560
          %v574 = vpack.c.b16 %v563, %v562
          %v575 = vpack.c.b16 %v565, %v564
          %v576 = vpack.c.b16 %v567, %v566
          %v577 = vpack.c.b16 %v569, %v568
          %586 = vmatprep.subr.bf16.mxu0 0
          %587 = vmatpush1.bf16.msra.mxu0 %v570
          %588 = vmatprep.subr.bf16.mxu0 0
          %589 = vmatpush1.bf16.msra.mxu0 %v571
          %590 = vmatprep.subr.bf16.mxu0 0
          %591 = vmatpush1.bf16.msra.mxu0 %v572
          %592 = vmatprep.subr.bf16.mxu0 0
          %593 = vmatpush1.bf16.msra.mxu0 %v573
          %594 = vmatprep.subr.bf16.mxu0 0
          %595 = vmatpush1.bf16.msra.mxu0 %v574
          %596 = vmatprep.subr.bf16.mxu0 0
          %597 = vmatpush1.bf16.msra.mxu0 %v575
          %598 = vmatprep.subr.bf16.mxu0 0
          %599 = vmatpush1.bf16.msra.mxu0 %v576
          %600 = vmatprep.subr.bf16.mxu0 0
          %601 = vmatpush1.bf16.msra.mxu0 %v577
          %602 = vmatprep.subr.bf16.mxu0 0
          %603 = vmatpush1.bf16.msra.mxu0 0
          %604 = vmatprep.subr.bf16.mxu0 0
          %605 = vmatpush1.bf16.msra.mxu0 0
          %606 = vmatprep.subr.bf16.mxu0 0
          %607 = vmatpush1.bf16.msra.mxu0 0
          %608 = vmatprep.subr.bf16.mxu0 0
          %609 = vmatpush1.bf16.msra.mxu0 0
          %610 = vmatprep.subr.bf16.mxu0 0
          %611 = vmatpush1.bf16.msra.mxu0 0
          %612 = vmatprep.subr.bf16.mxu0 0
          %613 = vmatpush1.bf16.msra.mxu0 0
          %614 = vmatprep.subr.bf16.mxu0 0
          %615 = vmatpush1.bf16.msra.mxu0 0
          %616 = vmatprep.subr.bf16.mxu0 0
          %617 = vmatpush1.bf16.msra.mxu0 0
          %618 = vmatprep.mubr.bf16.mxu0 0
          %619 = vmatmul.mubr.bf16.gmra.mrb[0].mxu0 %v536
          %v620 = vpop.f32.mrb[0].mxu0
          %v621 = vadd.f32 0.0, %v620
          %v622 = vpop.f32.mrb[0].mxu0
          %v623 = vpop.f32.mrb[0].mxu0
          %v624 = vadd.f32 0.0, %v623
          %v625 = vpop.f32.mrb[0].mxu0
          %626 = vdwg.mxu0
          %v627 = vld [vmem:[#allocation10] sm:$0xf]
          %v628 = vld [vmem:[#allocation10 + $0x4] sm:$0xf]
          %v629 = vld [vmem:[#allocation10 + $0x8] sm:$0xf]
          %v630 = vld [vmem:[#allocation10 + $0xc] sm:$0xf]
          %v631 = vld [vmem:[#allocation10 + $0x10] sm:$0xf]
          %v632 = vld [vmem:[#allocation10 + $0x14] sm:$0xf]
          %v633 = vld [vmem:[#allocation10 + $0x18] sm:$0xf]
          %v634 = vld [vmem:[#allocation10 + $0x1c] sm:$0xf]
          %v635 = vld [vmem:[#allocation10 + $0x20] sm:$0xf]
          %v636 = vld [vmem:[#allocation10 + $0x24] sm:$0xf]
          %v637 = vld [vmem:[#allocation10 + $0x28] sm:$0xf]
          %v638 = vld [vmem:[#allocation10 + $0x2c] sm:$0xf]
          %v639 = vld [vmem:[#allocation10 + $0x30] sm:$0xf]
          %v640 = vld [vmem:[#allocation10 + $0x34] sm:$0xf]
          %v641 = vld [vmem:[#allocation10 + $0x38] sm:$0xf]
          %v642 = vld [vmem:[#allocation10 + $0x3c] sm:$0xf]
          %v659 = vunpack.c.l.b16 %v627
          %v660 = vunpack.c.l.b16 %v628
          %v661 = vunpack.c.l.b16 %v629
          %v662 = vunpack.c.l.b16 %v630
          %v663 = vunpack.c.l.b16 %v631
          %v664 = vunpack.c.l.b16 %v632
          %v665 = vunpack.c.l.b16 %v633
          %v666 = vunpack.c.l.b16 %v634
          %v667 = vunpack.c.l.b16 %v635
          %v668 = vunpack.c.l.b16 %v636
          %v669 = vunpack.c.l.b16 %v637
          %v670 = vunpack.c.l.b16 %v638
          %v671 = vunpack.c.l.b16 %v639
          %v672 = vunpack.c.l.b16 %v640
          %v673 = vunpack.c.l.b16 %v641
          %v674 = vunpack.c.l.b16 %v642
          %v675 = vpack.c.b16 %v660, %v659
          %v676 = vpack.c.b16 %v662, %v661
          %v677 = vpack.c.b16 %v664, %v663
          %v678 = vpack.c.b16 %v666, %v665
          %v679 = vpack.c.b16 %v668, %v667
          %v680 = vpack.c.b16 %v670, %v669
          %v681 = vpack.c.b16 %v672, %v671
          %v682 = vpack.c.b16 %v674, %v673
          %691 = vmatprep.subr.bf16.mxu0 0
          %692 = vmatpush1.bf16.msra.mxu0 %v675
          %693 = vmatprep.subr.bf16.mxu0 0
          %694 = vmatpush1.bf16.msra.mxu0 %v676
          %695 = vmatprep.subr.bf16.mxu0 0
          %696 = vmatpush1.bf16.msra.mxu0 %v677
          %697 = vmatprep.subr.bf16.mxu0 0
          %698 = vmatpush1.bf16.msra.mxu0 %v678
          %699 = vmatprep.subr.bf16.mxu0 0
          %700 = vmatpush1.bf16.msra.mxu0 %v679
          %701 = vmatprep.subr.bf16.mxu0 0
          %702 = vmatpush1.bf16.msra.mxu0 %v680
          %703 = vmatprep.subr.bf16.mxu0 0
          %704 = vmatpush1.bf16.msra.mxu0 %v681
          %705 = vmatprep.subr.bf16.mxu0 0
          %706 = vmatpush1.bf16.msra.mxu0 %v682
          %707 = vmatprep.subr.bf16.mxu0 0
          %708 = vmatpush1.bf16.msra.mxu0 0
          %709 = vmatprep.subr.bf16.mxu0 0
          %710 = vmatpush1.bf16.msra.mxu0 0
          %711 = vmatprep.subr.bf16.mxu0 0
          %712 = vmatpush1.bf16.msra.mxu0 0
          %713 = vmatprep.subr.bf16.mxu0 0
          %714 = vmatpush1.bf16.msra.mxu0 0
          %715 = vmatprep.subr.bf16.mxu0 0
          %716 = vmatpush1.bf16.msra.mxu0 0
          %717 = vmatprep.subr.bf16.mxu0 0
          %718 = vmatpush1.bf16.msra.mxu0 0
          %719 = vmatprep.subr.bf16.mxu0 0
          %720 = vmatpush1.bf16.msra.mxu0 0
          %721 = vmatprep.subr.bf16.mxu0 0
          %722 = vmatpush1.bf16.msra.mxu0 0
          %723 = vmatprep.mubr.bf16.mxu0 0
          %724 = vmatmul.mubr.bf16.gmra.mrb[0].mxu0 %v536
          %v725 = vpop.f32.mrb[0].mxu0
          %v726 = vadd.f32 0.0, %v725
          %v727 = vpop.f32.mrb[0].mxu0
          %v728 = vpop.f32.mrb[0].mxu0
          %v729 = vadd.f32 0.0, %v728
          %v730 = vpop.f32.mrb[0].mxu0
          %731 = vdwg.mxu0
          %732 = vst [vmem:[#allocation4] sm:$0xff] %v726
          %733 = vst [vmem:[#allocation4 + $0x8] sm:$0xff] %v729
          %v734 = vlaneseq
          %v735 = vand.u32 %v734, 127
          %736 = vset.pattern.permute.xlu0 0
          %737 = vperm.xlu0 %736, %v510
          %v738 = vpop.permute.xlu0 %737
          %739 = vset.pattern.permute.xlu0 0
          %740 = vperm.xlu0 %739, %v511
          %v741 = vpop.permute.xlu0 %740
          %vm742 = vcmp.eq.s32.totalorder %v735, %v738
          %vm743 = vcmp.eq.s32.totalorder %v735, %v741
          %744 = vset.pattern.permute.xlu0 1
          %745 = vperm.xlu0 %744, %v510
          %v746 = vpop.permute.xlu0 %745
          %747 = vset.pattern.permute.xlu0 1
          %748 = vperm.xlu0 %747, %v511
          %v749 = vpop.permute.xlu0 %748
          %vm750 = vcmp.eq.s32.totalorder %v735, %v746
          %vm751 = vcmp.eq.s32.totalorder %v735, %v749
          %vm752 = vmor %vm742, %vm750
          %vm753 = vmor %vm743, %vm751
          %754 = vset.pattern.permute.xlu0 2
          %755 = vperm.xlu0 %754, %v510
          %v756 = vpop.permute.xlu0 %755
          %757 = vset.pattern.permute.xlu0 2
          %758 = vperm.xlu0 %757, %v511
          %v759 = vpop.permute.xlu0 %758
          %vm760 = vcmp.eq.s32.totalorder %v735, %v756
          %vm761 = vcmp.eq.s32.totalorder %v735, %v759
          %vm762 = vmor %vm752, %vm760
          %vm763 = vmor %vm753, %vm761
          %764 = vset.pattern.permute.xlu0 3
          %765 = vperm.xlu0 %764, %v510
          %v766 = vpop.permute.xlu0 %765
          %767 = vset.pattern.permute.xlu0 3
          %768 = vperm.xlu0 %767, %v511
          %v769 = vpop.permute.xlu0 %768
          %vm770 = vcmp.eq.s32.totalorder %v735, %v766
          %vm771 = vcmp.eq.s32.totalorder %v735, %v769
          %vm772 = vmor %vm762, %vm770
          %vm773 = vmor %vm763, %vm771
          %vm774 = vcmp.lt.s32.totalorder %v735, 16
          %vm775 = vmand %vm772, %vm774
          %vm776 = vmand %vm773, %vm774
          %v777 = vsel %vm775, 1, 0
          %v778 = vsel %vm776, 1, 0
          %v779 = vcvt.s32.f32 %v777
          %v780 = vcvt.s32.f32 %v778
          %v781 = vsel %vm774, 1, 0
          %v782 = vcvt.s32.f32 %v781
          %v783 = vand.u32 2147483647, %v621
          %v784 = vand.u32 2147483647, %v624
          %v785 = vsub.f32 0.0, %v783
          %v786 = vsub.f32 0.0, %v784
          %v787 = vmul.f32 %v785, 1.442695
          %v788 = vpow.pop %v787
          %v789 = vmul.f32 %v786, 1.442695
          %v790 = vpow.pop %v789
          %v791 = vadd.f32 %v788, 1.0
          %v792 = vlog2.pop %v791
          %v793 = vmul.f32 %v792, 0.6931472
          %v794 = vmul.f32 -0.5, %v788
          %v795 = vadd.f32 %v794, 1.0
          %v796 = vmul.f32 %v795, %v788
          %v797 = vand.u32 2147483647, %v788
          %vm798 = vcmp.lt.f32.partialorder %v797, 0.0004427343
          %v799 = vsel %vm798, %v796, %v793
          %v800 = vadd.f32 %v790, 1.0
          %v801 = vlog2.pop %v800
          %v802 = vmul.f32 %v801, 0.6931472
          %v803 = vmul.f32 -0.5, %v790
          %v804 = vadd.f32 %v803, 1.0
          %v805 = vmul.f32 %v804, %v790
          %v806 = vand.u32 2147483647, %v790
          %vm807 = vcmp.lt.f32.partialorder %v806, 0.0004427343
          %v808 = vsel %vm807, %v805, %v802
          %v809 = vsub.f32 0.0, %v621
          %v810 = vsub.f32 0.0, %v624
          %v811 = vmax.f32 %v809, 0.0
          %v812 = vmax.f32 %v810, 0.0
          %v813 = vadd.f32 %v811, %v799
          %v814 = vadd.f32 %v812, %v808
          %v815 = vmax.f32 %v621, 0.0
          %v816 = vmax.f32 %v624, 0.0
          %v817 = vadd.f32 %v815, %v799
          %v818 = vadd.f32 %v816, %v808
          %v819 = vld [vmem:[%s5] sm:$0x1]
          %v821 = vlaneseq
          %v822 = vshrl.u32 %v821, 7
          %v823 = vsub.s32 0, %v822
          %v824 = vrot.slane %v819, %v823
          %v826 = vmul.f32 %v824, %v779
          %v827 = vmul.f32 %v824, %v780
          %v828 = vmul.f32 %v826, %v813
          %v829 = vmul.f32 %v827, %v814
          %v830 = vsub.f32 1.0, %v779
          %v831 = vsub.f32 1.0, %v780
          %v832 = vmul.f32 %v830, %v817
          %v833 = vmul.f32 %v831, %v818
          %v834 = vadd.f32 %v828, %v832
          %v835 = vadd.f32 %v829, %v833
          %v836 = vmul.f32 %v834, %v782
          %v837 = vmul.f32 %v835, %v782
          %838 = vadd.xlane.f32.xlu0 %v836
          %v839 = vpop.xlane.xlu0 %838
          %840 = vadd.xlane.f32.xlu0 %v837
          %v841 = vpop.xlane.xlu0 %840
          %v842 = vld [vmem:[%s6] sm:$0x1]
          %v843 = vld [vmem:[%s7] sm:$0x1]
          %v844 = vadd.s32 %v842, %v843
          %v845 = vlaneseq
          %v846 = vshrl.u32 %v845, 7
          %v847 = vsub.s32 0, %v846
          %v848 = vrot.slane %v842, %v847
          %vm849 = vcmp.ge.s32.totalorder %v738, %v848
          %vm850 = vcmp.ge.s32.totalorder %v741, %v848
          %v851 = vlaneseq
          %v852 = vshrl.u32 %v851, 7
          %v853 = vsub.s32 0, %v852
          %v854 = vrot.slane %v844, %v853
          %vm855 = vcmp.lt.s32.totalorder %v738, %v854
          %vm856 = vcmp.lt.s32.totalorder %v741, %v854
          %vm857 = vmand %vm849, %vm855
          %vm858 = vmand %vm850, %vm856
          %vm859 = vcmp.ge.s32.totalorder %v746, %v848
          %vm860 = vcmp.ge.s32.totalorder %v749, %v848
          %vm861 = vcmp.lt.s32.totalorder %v746, %v854
          %vm862 = vcmp.lt.s32.totalorder %v749, %v854
          %vm863 = vmand %vm859, %vm861
          %vm864 = vmand %vm860, %vm862
          %vm865 = vmor %vm857, %vm863
          %vm866 = vmor %vm858, %vm864
          %vm867 = vcmp.ge.s32.totalorder %v756, %v848
          %vm868 = vcmp.ge.s32.totalorder %v759, %v848
          %vm869 = vcmp.lt.s32.totalorder %v756, %v854
          %vm870 = vcmp.lt.s32.totalorder %v759, %v854
          %vm871 = vmand %vm867, %vm869
          %vm872 = vmand %vm868, %vm870
          %vm873 = vmor %vm865, %vm871
          %vm874 = vmor %vm866, %vm872
          %vm875 = vcmp.ge.s32.totalorder %v766, %v848
          %vm876 = vcmp.ge.s32.totalorder %v769, %v848
          %vm877 = vcmp.lt.s32.totalorder %v766, %v854
          %vm878 = vcmp.lt.s32.totalorder %v769, %v854
          %vm879 = vmand %vm875, %vm877
          %vm880 = vmand %vm876, %vm878
          %vm881 = vmor %vm873, %vm879
          %vm882 = vmor %vm874, %vm880
          %v883 = vsel %vm881, 1, 0
          %v884 = vsel %vm882, 1, 0
          %v885 = vcvt.s32.f32 %v883
          %v886 = vcvt.s32.f32 %v884
          %vm887 = vcmp.lt.s32.totalorder %v735, 2
          %v888 = vsel %vm887, 1, 0
          %v889 = vcvt.s32.f32 %v888
          %v890 = vmax.f32 %v726, 0.0
          %v891 = vmax.f32 %v729, 0.0
          %v892 = vand.u32 2147483647, %v726
          %v893 = vand.u32 2147483647, %v729
          %v894 = vsub.f32 0.0, %v892
          %v895 = vsub.f32 0.0, %v893
          %v896 = vmul.f32 %v894, 1.442695
          %v897 = vpow.pop %v896
          %v898 = vmul.f32 %v895, 1.442695
          %v899 = vpow.pop %v898
          %v900 = vadd.f32 %v897, 1.0
          %v901 = vlog2.pop %v900
          %v902 = vmul.f32 %v901, 0.6931472
          %v903 = vmul.f32 -0.5, %v897
          %v904 = vadd.f32 %v903, 1.0
          %v905 = vmul.f32 %v904, %v897
          %v906 = vand.u32 2147483647, %v897
          %vm907 = vcmp.lt.f32.partialorder %v906, 0.0004427343
          %v908 = vsel %vm907, %v905, %v902
          %v909 = vadd.f32 %v899, 1.0
          %v910 = vlog2.pop %v909
          %v911 = vmul.f32 %v910, 0.6931472
          %v912 = vmul.f32 -0.5, %v899
          %v913 = vadd.f32 %v912, 1.0
          %v914 = vmul.f32 %v913, %v899
          %v915 = vand.u32 2147483647, %v899
          %vm916 = vcmp.lt.f32.partialorder %v915, 0.0004427343
          %v917 = vsel %vm916, %v914, %v911
          %v918 = vadd.f32 %v890, %v908
          %v919 = vadd.f32 %v891, %v917
          %v920 = vsub.f32 1.0, %v885
          %v921 = vsub.f32 1.0, %v886
          %v922 = vmul.f32 %v889, %v920
          %v923 = vmul.f32 %v889, %v921
          %v924 = vmul.f32 %v922, %v918
          %v925 = vmul.f32 %v923, %v919
          %926 = vadd.xlane.f32.xlu0 %v924
          %v927 = vpop.xlane.xlu0 %926
          %928 = vadd.xlane.f32.xlu0 %v925
          %v929 = vpop.xlane.xlu0 %928
          %v930 = vcvt.s32.f32 %v843
          %v932 = vlaneseq
          %v933 = vshrl.u32 %v932, 7
          %v934 = vsub.s32 0, %v933
          %v935 = vrot.slane %v930, %v934
          %v937 = vmul.f32 %v885, %v935
          %v938 = vmul.f32 %v886, %v935
          %v939 = vadd.f32 %v920, %v937
          %v940 = vadd.f32 %v921, %v938
          %v941 = vmul.f32 %v889, %v939
          %v942 = vmul.f32 %v889, %v940
          %943 = vadd.xlane.f32.xlu0 %v941
          %v944 = vpop.xlane.xlu0 %943
          %945 = vadd.xlane.f32.xlu0 %v942
          %v946 = vpop.xlane.xlu0 %945
          %v947 = vadd.f32 %v944, 16.0
          %v948 = vadd.f32 %v946, 16.0
          %v949 = vadd.f32 %v839, %v927
          %v950 = vadd.f32 %v841, %v929
          %vm951 = vcmask 7168
          %952 = vst.msk [vmem:[#allocation2] sm:$0xff] %vm951, %v949
          %953 = vst.msk [vmem:[#allocation2 + $0x8] sm:$0xff] %vm951, %v950
          %954 = vst.msk [vmem:[#allocation3] sm:$0xff] %vm951, %v947
          %955 = vst.msk [vmem:[#allocation3 + $0x8] sm:$0xff] %vm951, %v948
        $region88: #{tpu_custom_call.1} parent=67 // pred_fallthru
          _
        %s956 = smul.u32 %s39, 128
        %s957 = sld [smem:[#allocation6 + %s956]]
        %s958 = sadd.s32 %s956, 1
        %s959 = sld [smem:[#allocation6 + %s958]]
        %s960 = sadd.s32 %s956, 2
        %s961 = sld [smem:[#allocation6 + %s960]]
        %s962 = smul.u32 %s39, 16
        %s963 = smul.addr %s962, 4
        %s964 = scalar_lea.vmem [#allocation12], %s963
        %v965 = vld [vmem:[%s964] sm:$0xf]
        %v966 = vld [vmem:[%s964 + $0x4] sm:$0xf]
        %v967 = vld [vmem:[%s964 + $0x8] sm:$0xf]
        %v968 = vld [vmem:[%s964 + $0xc] sm:$0xf]
        %v969 = vld [vmem:[%s964 + $0x10] sm:$0xf]
        %v970 = vld [vmem:[%s964 + $0x14] sm:$0xf]
        %v971 = vld [vmem:[%s964 + $0x18] sm:$0xf]
        %v972 = vld [vmem:[%s964 + $0x1c] sm:$0xf]
        %v973 = vld [vmem:[%s964 + $0x20] sm:$0xf]
        %v974 = vld [vmem:[%s964 + $0x24] sm:$0xf]
        %v975 = vld [vmem:[%s964 + $0x28] sm:$0xf]
        %v976 = vld [vmem:[%s964 + $0x2c] sm:$0xf]
        %v977 = vld [vmem:[%s964 + $0x30] sm:$0xf]
        %v978 = vld [vmem:[%s964 + $0x34] sm:$0xf]
        %v979 = vld [vmem:[%s964 + $0x38] sm:$0xf]
        %v980 = vld [vmem:[%s964 + $0x3c] sm:$0xf]
        %s981 = scalar_lea.vmem %s9, %s39
        %v982 = vld [vmem:[%s981] sm:$0x1]
        %s983 = scalar_lea.vmem %s10, %s39
        %v984 = vld [vmem:[%s983] sm:$0x1]
        %s985 = smul.addr %s962, 4
        %s986 = scalar_lea.vmem [#allocation13], %s985
        %v987 = vld [vmem:[%s986] sm:$0xf]
        %v988 = vld [vmem:[%s986 + $0x4] sm:$0xf]
        %v989 = vld [vmem:[%s986 + $0x8] sm:$0xf]
        %v990 = vld [vmem:[%s986 + $0xc] sm:$0xf]
        %v991 = vld [vmem:[%s986 + $0x10] sm:$0xf]
        %v992 = vld [vmem:[%s986 + $0x14] sm:$0xf]
        %v993 = vld [vmem:[%s986 + $0x18] sm:$0xf]
        %v994 = vld [vmem:[%s986 + $0x1c] sm:$0xf]
        %v995 = vld [vmem:[%s986 + $0x20] sm:$0xf]
        %v996 = vld [vmem:[%s986 + $0x24] sm:$0xf]
        %v997 = vld [vmem:[%s986 + $0x28] sm:$0xf]
        %v998 = vld [vmem:[%s986 + $0x2c] sm:$0xf]
        %v999 = vld [vmem:[%s986 + $0x30] sm:$0xf]
        %v1000 = vld [vmem:[%s986 + $0x34] sm:$0xf]
        %v1001 = vld [vmem:[%s986 + $0x38] sm:$0xf]
        %v1002 = vld [vmem:[%s986 + $0x3c] sm:$0xf]
        %s1003 = scalar_lea.vmem %s12, %s39
        %v1004 = vld [vmem:[%s1003] sm:$0x1]
        %v1007 = vunpack.c.l.b16 %v508
        %v1008 = vunpack.c.l.b16 %v509
        %v1009 = vpack.c.b16 %v1008, %v1007
        %v1027 = vunpack.c.l.b16 %v965
        %v1028 = vunpack.c.l.b16 %v966
        %v1029 = vunpack.c.l.b16 %v967
        %v1030 = vunpack.c.l.b16 %v968
        %v1031 = vunpack.c.l.b16 %v969
        %v1032 = vunpack.c.l.b16 %v970
        %v1033 = vunpack.c.l.b16 %v971
        %v1034 = vunpack.c.l.b16 %v972
        %v1035 = vunpack.c.l.b16 %v973
        %v1036 = vunpack.c.l.b16 %v974
        %v1037 = vunpack.c.l.b16 %v975
        %v1038 = vunpack.c.l.b16 %v976
        %v1039 = vunpack.c.l.b16 %v977
        %v1040 = vunpack.c.l.b16 %v978
        %v1041 = vunpack.c.l.b16 %v979
        %v1042 = vunpack.c.l.b16 %v980
        %v1043 = vpack.c.b16 %v1028, %v1027
        %v1044 = vpack.c.b16 %v1030, %v1029
        %v1045 = vpack.c.b16 %v1032, %v1031
        %v1046 = vpack.c.b16 %v1034, %v1033
        %v1047 = vpack.c.b16 %v1036, %v1035
        %v1048 = vpack.c.b16 %v1038, %v1037
        %v1049 = vpack.c.b16 %v1040, %v1039
        %v1050 = vpack.c.b16 %v1042, %v1041
        %1059 = vmatprep.subr.bf16.mxu0 0
        %1060 = vmatpush1.bf16.msra.mxu0 %v1043
        %1061 = vmatprep.subr.bf16.mxu0 0
        %1062 = vmatpush1.bf16.msra.mxu0 %v1044
        %1063 = vmatprep.subr.bf16.mxu0 0
        %1064 = vmatpush1.bf16.msra.mxu0 %v1045
        %1065 = vmatprep.subr.bf16.mxu0 0
        %1066 = vmatpush1.bf16.msra.mxu0 %v1046
        %1067 = vmatprep.subr.bf16.mxu0 0
        %1068 = vmatpush1.bf16.msra.mxu0 %v1047
        %1069 = vmatprep.subr.bf16.mxu0 0
        %1070 = vmatpush1.bf16.msra.mxu0 %v1048
        %1071 = vmatprep.subr.bf16.mxu0 0
        %1072 = vmatpush1.bf16.msra.mxu0 %v1049
        %1073 = vmatprep.subr.bf16.mxu0 0
        %1074 = vmatpush1.bf16.msra.mxu0 %v1050
        %1075 = vmatprep.subr.bf16.mxu0 0
        %1076 = vmatpush1.bf16.msra.mxu0 0
        %1077 = vmatprep.subr.bf16.mxu0 0
        %1078 = vmatpush1.bf16.msra.mxu0 0
        %1079 = vmatprep.subr.bf16.mxu0 0
        %1080 = vmatpush1.bf16.msra.mxu0 0
        %1081 = vmatprep.subr.bf16.mxu0 0
        %1082 = vmatpush1.bf16.msra.mxu0 0
        %1083 = vmatprep.subr.bf16.mxu0 0
        %1084 = vmatpush1.bf16.msra.mxu0 0
        %1085 = vmatprep.subr.bf16.mxu0 0
        %1086 = vmatpush1.bf16.msra.mxu0 0
        %1087 = vmatprep.subr.bf16.mxu0 0
        %1088 = vmatpush1.bf16.msra.mxu0 0
        %1089 = vmatprep.subr.bf16.mxu0 0
        %1090 = vmatpush1.bf16.msra.mxu0 0
        %1091 = vmatprep.mubr.bf16.mxu0 0
        %1092 = vmatmul.mubr.bf16.gmra.mrb[0].mxu0 %v1009
        %v1093 = vpop.f32.mrb[0].mxu0
        %v1094 = vadd.f32 0.0, %v1093
        %v1095 = vpop.f32.mrb[0].mxu0
        %v1096 = vpop.f32.mrb[0].mxu0
        %v1097 = vadd.f32 0.0, %v1096
        %v1098 = vpop.f32.mrb[0].mxu0
        %1099 = vdwg.mxu0
        %v1100 = vlaneseq
        %v1101 = vand.u32 %v1100, 127
        %v1102 = vstv %s961
        %vm1103 = vcmp.lt.s32.totalorder %v1101, %v1102
        %v1104 = vsel %vm1103, 1, 0
        %v1105 = vcvt.s32.f32 %v1104
        %s1106 = scvt.s32.f32 %s961
        %v1107 = vstv %s1106
        %v1108 = vrcp.pop %v1107
        %s1109 = vtos %v1108
        %v1110 = vmul.f32 %v1094, %v1105
        %v1111 = vmul.f32 %v1097, %v1105
        %1112 = vadd.xlane.f32.xlu0 %v1110
        %v1113 = vpop.xlane.xlu0 %1112
        %1114 = vadd.xlane.f32.xlu0 %v1111
        %v1115 = vpop.xlane.xlu0 %1114
        %v1116 = vstv %s1109
        %v1117 = vmul.f32 %v1113, %v1116
        %v1118 = vmul.f32 %v1115, %v1116
        %v1119 = vsub.f32 %v1094, %v1117
        %v1120 = vsub.f32 %v1097, %v1118
        %v1121 = vmul.f32 %v1119, %v1105
        %v1122 = vmul.f32 %v1120, %v1105
        %v1123 = vmul.f32 %v1121, %v1121
        %v1124 = vmul.f32 %v1122, %v1122
        %1125 = vadd.xlane.f32.xlu0 %v1123
        %v1126 = vpop.xlane.xlu0 %1125
        %1127 = vadd.xlane.f32.xlu0 %v1124
        %v1128 = vpop.xlane.xlu0 %1127
        %v1129 = vmul.f32 %v1126, %v1116
        %v1130 = vmul.f32 %v1128, %v1116
        %v1131 = vadd.f32 %v1129, 1e-05
        %v1132 = vadd.f32 %v1130, 1e-05
        %v1133 = vrsqrt.pop %v1131
        %v1134 = vrsqrt.pop %v1132
        %v1135 = vmul.f32 %v1119, %v1133
        %v1136 = vmul.f32 %v1120, %v1134
        %v1138 = vlaneseq
        %v1139 = vshrl.u32 %v1138, 7
        %v1140 = vsub.s32 0, %v1139
        %v1141 = vrot.slane %v982, %v1140
        %v1143 = vmul.f32 %v1135, %v1141
        %v1144 = vmul.f32 %v1136, %v1141
        %v1146 = vlaneseq
        %v1147 = vshrl.u32 %v1146, 7
        %v1148 = vsub.s32 0, %v1147
        %v1149 = vrot.slane %v984, %v1148
        %v1151 = vadd.f32 %v1143, %v1149
        %v1152 = vadd.f32 %v1144, %v1149
        %v1153 = vmax.f32 %v1151, 0.0
        %v1154 = vmax.f32 %v1152, 0.0
        %v1155 = vpack.c.bf16 %v1154, %v1153
        %v1172 = vunpack.c.l.b16 %v987
        %v1173 = vunpack.c.l.b16 %v988
        %v1174 = vunpack.c.l.b16 %v989
        %v1175 = vunpack.c.l.b16 %v990
        %v1176 = vunpack.c.l.b16 %v991
        %v1177 = vunpack.c.l.b16 %v992
        %v1178 = vunpack.c.l.b16 %v993
        %v1179 = vunpack.c.l.b16 %v994
        %v1180 = vunpack.c.l.b16 %v995
        %v1181 = vunpack.c.l.b16 %v996
        %v1182 = vunpack.c.l.b16 %v997
        %v1183 = vunpack.c.l.b16 %v998
        %v1184 = vunpack.c.l.b16 %v999
        %v1185 = vunpack.c.l.b16 %v1000
        %v1186 = vunpack.c.l.b16 %v1001
        %v1187 = vunpack.c.l.b16 %v1002
        %v1188 = vpack.c.b16 %v1173, %v1172
        %v1189 = vpack.c.b16 %v1175, %v1174
        %v1190 = vpack.c.b16 %v1177, %v1176
        %v1191 = vpack.c.b16 %v1179, %v1178
        %v1192 = vpack.c.b16 %v1181, %v1180
        %v1193 = vpack.c.b16 %v1183, %v1182
        %v1194 = vpack.c.b16 %v1185, %v1184
        %v1195 = vpack.c.b16 %v1187, %v1186
        %1204 = vmatprep.subr.bf16.mxu0 0
        %1205 = vmatpush1.bf16.msra.mxu0 %v1188
        %1206 = vmatprep.subr.bf16.mxu0 0
        %1207 = vmatpush1.bf16.msra.mxu0 %v1189
        %1208 = vmatprep.subr.bf16.mxu0 0
        %1209 = vmatpush1.bf16.msra.mxu0 %v1190
        %1210 = vmatprep.subr.bf16.mxu0 0
        %1211 = vmatpush1.bf16.msra.mxu0 %v1191
        %1212 = vmatprep.subr.bf16.mxu0 0
        %1213 = vmatpush1.bf16.msra.mxu0 %v1192
        %1214 = vmatprep.subr.bf16.mxu0 0
        %1215 = vmatpush1.bf16.msra.mxu0 %v1193
        %1216 = vmatprep.subr.bf16.mxu0 0
        %1217 = vmatpush1.bf16.msra.mxu0 %v1194
        %1218 = vmatprep.subr.bf16.mxu0 0
        %1219 = vmatpush1.bf16.msra.mxu0 %v1195
        %1220 = vmatprep.subr.bf16.mxu0 0
        %1221 = vmatpush1.bf16.msra.mxu0 0
        %1222 = vmatprep.subr.bf16.mxu0 0
        %1223 = vmatpush1.bf16.msra.mxu0 0
        %1224 = vmatprep.subr.bf16.mxu0 0
        %1225 = vmatpush1.bf16.msra.mxu0 0
        %1226 = vmatprep.subr.bf16.mxu0 0
        %1227 = vmatpush1.bf16.msra.mxu0 0
        %1228 = vmatprep.subr.bf16.mxu0 0
        %1229 = vmatpush1.bf16.msra.mxu0 0
        %1230 = vmatprep.subr.bf16.mxu0 0
        %1231 = vmatpush1.bf16.msra.mxu0 0
        %1232 = vmatprep.subr.bf16.mxu0 0
        %1233 = vmatpush1.bf16.msra.mxu0 0
        %1234 = vmatprep.subr.bf16.mxu0 0
        %1235 = vmatpush1.bf16.msra.mxu0 0
        %1236 = vmatprep.mubr.bf16.mxu0 0
        %1237 = vmatmul.mubr.bf16.gmra.mrb[0].mxu0 %v1155
        %v1238 = vpop.f32.mrb[0].mxu0
        %v1239 = vadd.f32 0.0, %v1238
        %v1240 = vpop.f32.mrb[0].mxu0
        %v1241 = vpop.f32.mrb[0].mxu0
        %v1242 = vadd.f32 0.0, %v1241
        %v1243 = vpop.f32.mrb[0].mxu0
        %1244 = vdwg.mxu0
        %v1245 = vstv %s957
        %v1246 = vadd.s32 %v1101, %v1245
        %1247 = vset.pattern.permute.xlu0 0
        %1248 = vperm.xlu0 %1247, %v510
        %v1249 = vpop.permute.xlu0 %1248
        %1250 = vset.pattern.permute.xlu0 0
        %1251 = vperm.xlu0 %1250, %v511
        %v1252 = vpop.permute.xlu0 %1251
        %vm1253 = vcmp.eq.s32.totalorder %v1249, %v1246
        %vm1254 = vcmp.eq.s32.totalorder %v1252, %v1246
        %vm1255 = vcmp.ge.s32.totalorder %v510, %v1245
        %vm1256 = vcmp.ge.s32.totalorder %v511, %v1245
        %s1257 = sadd.s32 %s957, %s959
        %v1258 = vstv %s1257
        %vm1259 = vcmp.lt.s32.totalorder %v510, %v1258
        %vm1260 = vcmp.lt.s32.totalorder %v511, %v1258
        %vm1261 = vmand %vm1255, %vm1259
        %vm1262 = vmand %vm1256, %vm1260
        %1263 = vset.pattern.permute.xlu0 1
        %1264 = vperm.xlu0 %1263, %v510
        %v1265 = vpop.permute.xlu0 %1264
        %1266 = vset.pattern.permute.xlu0 1
        %1267 = vperm.xlu0 %1266, %v511
        %v1268 = vpop.permute.xlu0 %1267
        %vm1269 = vcmp.eq.s32.totalorder %v1265, %v1246
        %vm1270 = vcmp.eq.s32.totalorder %v1268, %v1246
        %vm1271 = vmor %vm1253, %vm1269
        %vm1272 = vmor %vm1254, %vm1270
        %v1273 = vsel %vm1261, 1, 0
        %v1274 = vsel %vm1262, 1, 0
        %1275 = vrot.lane.b32.xlu0 %v1273, 127
        %v1276 = vpop.permute.xlu0 %1275
        %1277 = vrot.lane.b32.xlu0 %v1274, 127
        %v1278 = vpop.permute.xlu0 %1277
        %vm1279 = vcmp.ne.s32.totalorder %v1276, 0
        %vm1280 = vcmp.ne.s32.totalorder %v1278, 0
        %vm1281 = vmor %vm1261, %vm1279
        %vm1282 = vmor %vm1262, %vm1280
        %1283 = vset.pattern.permute.xlu0 2
        %1284 = vperm.xlu0 %1283, %v510
        %v1285 = vpop.permute.xlu0 %1284
        %1286 = vset.pattern.permute.xlu0 2
        %1287 = vperm.xlu0 %1286, %v511
        %v1288 = vpop.permute.xlu0 %1287
        %vm1289 = vcmp.eq.s32.totalorder %v1285, %v1246
        %vm1290 = vcmp.eq.s32.totalorder %v1288, %v1246
        %vm1291 = vmor %vm1271, %vm1289
        %vm1292 = vmor %vm1272, %vm1290
        %1293 = vrot.lane.b32.xlu0 %v1273, 126
        %v1294 = vpop.permute.xlu0 %1293
        %1295 = vrot.lane.b32.xlu0 %v1274, 126
        %v1296 = vpop.permute.xlu0 %1295
        %vm1297 = vcmp.ne.s32.totalorder %v1294, 0
        %vm1298 = vcmp.ne.s32.totalorder %v1296, 0
        %vm1299 = vmor %vm1281, %vm1297
        %vm1300 = vmor %vm1282, %vm1298
        %1301 = vset.pattern.permute.xlu0 3
        %1302 = vperm.xlu0 %1301, %v510
        %v1303 = vpop.permute.xlu0 %1302
        %1304 = vset.pattern.permute.xlu0 3
        %1305 = vperm.xlu0 %1304, %v511
        %v1306 = vpop.permute.xlu0 %1305
        %vm1307 = vcmp.eq.s32.totalorder %v1303, %v1246
        %vm1308 = vcmp.eq.s32.totalorder %v1306, %v1246
        %vm1309 = vmor %vm1291, %vm1307
        %vm1310 = vmor %vm1292, %vm1308
        %1311 = vrot.lane.b32.xlu0 %v1273, 125
        %v1312 = vpop.permute.xlu0 %1311
        %1313 = vrot.lane.b32.xlu0 %v1274, 125
        %v1314 = vpop.permute.xlu0 %1313
        %vm1315 = vcmp.ne.s32.totalorder %v1312, 0
        %vm1316 = vcmp.ne.s32.totalorder %v1314, 0
        %vm1317 = vmor %vm1299, %vm1315
        %vm1318 = vmor %vm1300, %vm1316
        %v1319 = vsel %vm1309, 1, 0
        %v1320 = vsel %vm1310, 1, 0
        %v1321 = vcvt.s32.f32 %v1319
        %v1322 = vcvt.s32.f32 %v1320
        %v1323 = vsel %vm1317, 1, 0
        %v1324 = vsel %vm1318, 1, 0
        %v1325 = vcvt.s32.f32 %v1323
        %v1326 = vcvt.s32.f32 %v1324
        %v1327 = vstv %s959
        %vm1328 = vcmp.lt.s32.totalorder %v1101, %v1327
        %v1329 = vsel %vm1328, 1, 0
        %v1330 = vcvt.s32.f32 %v1329
        %v1331 = vstv %s39
        %vm1332 = vcmp.eq.s32.totalorder %v1101, %v1331
        %v1333 = vsel %vm1332, 1, 0
        %v1334 = vcvt.s32.f32 %v1333
        %v1335 = vld [vmem:[#allocation4] sm:$0xff]
        %v1336 = vld [vmem:[#allocation4 + $0x8] sm:$0xff]
        %v1337 = vmul.f32 %v1335, %v1334
        %v1338 = vmul.f32 %v1336, %v1334
        %1339 = vadd.xlane.f32.xlu0 %v1337
        %v1340 = vpop.xlane.xlu0 %1339
        %1341 = vadd.xlane.f32.xlu0 %v1338
        %v1342 = vpop.xlane.xlu0 %1341
        %v1343 = vsub.f32 0.0, %v1340
        %v1344 = vsub.f32 0.0, %v1342
        %v1345 = vmax.f32 %v1343, 0.0
        %v1346 = vmax.f32 %v1344, 0.0
        %v1347 = vand.u32 2147483647, %v1340
        %v1348 = vand.u32 2147483647, %v1342
        %v1349 = vsub.f32 0.0, %v1347
        %v1350 = vsub.f32 0.0, %v1348
        %v1351 = vmul.f32 %v1349, 1.442695
        %v1352 = vpow.pop %v1351
        %v1353 = vmul.f32 %v1350, 1.442695
        %v1354 = vpow.pop %v1353
        %v1355 = vadd.f32 %v1352, 1.0
        %v1356 = vlog2.pop %v1355
        %v1357 = vmul.f32 %v1356, 0.6931472
        %v1358 = vmul.f32 -0.5, %v1352
        %v1359 = vadd.f32 %v1358, 1.0
        %v1360 = vmul.f32 %v1359, %v1352
        %v1361 = vand.u32 2147483647, %v1352
        %vm1362 = vcmp.lt.f32.partialorder %v1361, 0.0004427343
        %v1363 = vsel %vm1362, %v1360, %v1357
        %v1364 = vadd.f32 %v1354, 1.0
        %v1365 = vlog2.pop %v1364
        %v1366 = vmul.f32 %v1365, 0.6931472
        %v1367 = vmul.f32 -0.5, %v1354
        %v1368 = vadd.f32 %v1367, 1.0
        %v1369 = vmul.f32 %v1368, %v1354
        %v1370 = vand.u32 2147483647, %v1354
        %vm1371 = vcmp.lt.f32.partialorder %v1370, 0.0004427343
        %v1372 = vsel %vm1371, %v1369, %v1366
        %v1373 = vadd.f32 %v1345, %v1363
        %v1374 = vadd.f32 %v1346, %v1372
        %v1375 = vsub.f32 0.0, %v1239
        %v1376 = vsub.f32 0.0, %v1242
        %v1377 = vmax.f32 %v1375, 0.0
        %v1378 = vmax.f32 %v1376, 0.0
        %v1379 = vand.u32 2147483647, %v1239
        %v1380 = vand.u32 2147483647, %v1242
        %v1381 = vsub.f32 0.0, %v1379
        %v1382 = vsub.f32 0.0, %v1380
        %v1383 = vmul.f32 %v1381, 1.442695
        %v1384 = vpow.pop %v1383
        %v1385 = vmul.f32 %v1382, 1.442695
        %v1386 = vpow.pop %v1385
        %v1387 = vadd.f32 %v1384, 1.0
        %v1388 = vlog2.pop %v1387
        %v1389 = vmul.f32 %v1388, 0.6931472
        %v1390 = vmul.f32 -0.5, %v1384
        %v1391 = vadd.f32 %v1390, 1.0
        %v1392 = vmul.f32 %v1391, %v1384
        %v1393 = vand.u32 2147483647, %v1384
        %vm1394 = vcmp.lt.f32.partialorder %v1393, 0.0004427343
        %v1395 = vsel %vm1394, %v1392, %v1389
        %v1396 = vadd.f32 %v1386, 1.0
        %v1397 = vlog2.pop %v1396
        %v1398 = vmul.f32 %v1397, 0.6931472
        %v1399 = vmul.f32 -0.5, %v1386
        %v1400 = vadd.f32 %v1399, 1.0
        %v1401 = vmul.f32 %v1400, %v1386
        %v1402 = vand.u32 2147483647, %v1386
        %vm1403 = vcmp.lt.f32.partialorder %v1402, 0.0004427343
        %v1404 = vsel %vm1403, %v1401, %v1398
        %v1405 = vadd.f32 %v1377, %v1395
        %v1406 = vadd.f32 %v1378, %v1404
        %v1407 = vsub.f32 0.0, %v1373
        %v1408 = vsub.f32 0.0, %v1374
        %v1409 = vsub.f32 %v1407, %v1405
        %v1410 = vsub.f32 %v1408, %v1406
        %v1411 = vmax.f32 %v1409, -100.0
        %v1412 = vmax.f32 %v1410, -100.0
        %v1413 = vmul.f32 %v1411, 1.442695
        %v1414 = vpow.pop %v1413
        %v1415 = vmul.f32 %v1412, 1.442695
        %v1416 = vpow.pop %v1415
        %v1417 = vsub.f32 0.0, %v1414
        %v1418 = vsub.f32 0.0, %v1416
        %v1419 = vadd.f32 %v1417, 1.0
        %v1420 = vlog2.pop %v1419
        %v1421 = vmul.f32 %v1420, 0.6931472
        %v1422 = vmul.f32 -0.5, %v1417
        %v1423 = vadd.f32 %v1422, 1.0
        %v1424 = vmul.f32 %v1423, %v1417
        %v1425 = vand.u32 2147483647, %v1417
        %vm1426 = vcmp.lt.f32.partialorder %v1425, 0.0004427343
        %v1427 = vsel %vm1426, %v1424, %v1421
        %v1428 = vadd.f32 %v1418, 1.0
        %v1429 = vlog2.pop %v1428
        %v1430 = vmul.f32 %v1429, 0.6931472
        %v1431 = vmul.f32 -0.5, %v1418
        %v1432 = vadd.f32 %v1431, 1.0
        %v1433 = vmul.f32 %v1432, %v1418
        %v1434 = vand.u32 2147483647, %v1418
        %vm1435 = vcmp.lt.f32.partialorder %v1434, 0.0004427343
        %v1436 = vsel %vm1435, %v1433, %v1430
        %v1437 = vmax.f32 %v1427, -100.0
        %v1438 = vmax.f32 %v1436, -100.0
        %v1440 = vlaneseq
        %v1441 = vshrl.u32 %v1440, 7
        %v1442 = vsub.s32 0, %v1441
        %v1443 = vrot.slane %v1004, %v1442
        %v1445 = vmul.f32 %v1443, %v1321
        %v1446 = vmul.f32 %v1443, %v1322
        %v1447 = vsub.f32 0.0, %v1445
        %v1448 = vsub.f32 0.0, %v1446
        %v1449 = vmul.f32 %v1447, %v1411
        %v1450 = vmul.f32 %v1448, %v1412
        %v1451 = vsub.f32 1.0, %v1321
        %v1452 = vsub.f32 1.0, %v1322
        %v1453 = vmul.f32 %v1451, %v1437
        %v1454 = vmul.f32 %v1452, %v1438
        %v1455 = vsub.f32 %v1449, %v1453
        %v1456 = vsub.f32 %v1450, %v1454
        %v1457 = vmul.f32 %v1455, %v1330
        %v1458 = vmul.f32 %v1456, %v1330
        %1459 = vadd.xlane.f32.xlu0 %v1457
        %v1460 = vpop.xlane.xlu0 %1459
        %1461 = vadd.xlane.f32.xlu0 %v1458
        %v1462 = vpop.xlane.xlu0 %1461
        %v1463 = vmul.f32 %v1460, %v1325
        %v1464 = vmul.f32 %v1462, %v1326
        %v1465 = vld [vmem:[#allocation2] sm:$0xff]
        %v1466 = vld [vmem:[#allocation2 + $0x8] sm:$0xff]
        %v1467 = vadd.f32 %v1465, %v1463
        %v1468 = vadd.f32 %v1466, %v1464
        %vm1469 = vcmask 7168
        %1470 = vst.msk [vmem:[#allocation2] sm:$0xff] %vm1469, %v1467
        %1471 = vst.msk [vmem:[#allocation2 + $0x8] sm:$0xff] %vm1469, %v1468
        %p1472 = scmp.eq.s32.totalorder %s39, 1
        // Predicated region
        $region89: #{tpu_custom_call.1} parent=67 // pred_check
          %p1473 = pneg %p1472
        $region90: #{tpu_custom_call.1} parent=67 // pred_check_branch
          %1475 = sbr.rel (%p1473) target = $region92
        $region91: #{tpu_custom_call.1} parent=67 // pred_region
          %v1476 = vld [vmem:[#allocation2] sm:$0xff]
          %v1477 = vld [vmem:[#allocation2 + $0x8] sm:$0xff]
          %v1478 = vld [vmem:[#allocation3] sm:$0xff]
          %v1479 = vld [vmem:[#allocation3 + $0x8] sm:$0xff]
          %v1480 = vrcp.pop %v1478
          %v1481 = vmul.f32 %v1476, %v1480
          %v1482 = vrcp.pop %v1479
          %v1483 = vmul.f32 %v1477, %v1482
          %v1484 = vlaneseq
          %v1485 = vshrl.u32 %v1484, 7
          %v1486 = vadd.s32 %v1485, 8
          %s1487 = smul.u32 %s38, 16
          %v1488 = vstv %s1487
          %v1489 = vadd.s32 %v1485, %v1488
          %v1490 = vadd.s32 %v1486, %v1488
          %vm1491 = vcmp.lt.s32.totalorder %v1489, 8
          %vm1492 = vcmp.lt.s32.totalorder %v1490, 8
          %v1493 = vsel %vm1491, 1, 0
          %v1494 = vsel %vm1492, 1, 0
          %v1495 = vcvt.s32.f32 %v1493
          %v1496 = vcvt.s32.f32 %v1494
          %v1497 = vmul.f32 %v1481, %v1495
          %v1498 = vmul.f32 %v1483, %v1496
          %v1499 = vsel %vm1469, %v1497, 0.0
          %v1500 = vsel %vm1469, %v1498, 0.0
          %v1501 = vadd.f32 %v1499, %v1500
          %v1502 = vrot.slane %v1501, 4
          %v1503 = vadd.f32 %v1501, %v1502
          %v1504 = vrot.slane %v1503, 2
          %v1505 = vadd.f32 %v1503, %v1504
          %v1506 = vrot.slane %v1505, 1
          %v1507 = vadd.f32 %v1505, %v1506
          %1509 = vset.pattern.permute.xlu0 0
          %1510 = vperm.xlu0 %1509, %v1507
          %v1511 = vpop.permute.xlu0 %1510
          %1513 = vst [vmem:[#allocation15] sm:$0x1] %v1511
        $region92: #{tpu_custom_call.1} parent=67 // pred_fallthru
          _
        // Predicated region
        $region93: #{tpu_custom_call.1} parent=67 // pred_check
          %p1514 = pneg %p326
        $region94: #{tpu_custom_call.1} parent=67 // pred_check_branch
          %1516 = sbr.rel (%p1514) target = $region96
        $region95: #{tpu_custom_call.1} parent=67 // pred_region
          %s1518 = ssub.s32 16, 16
          %1519 = vsyncadd [#allocation9], %s1518
          %s1520 = smul.addr %s38, 16
          %s1521 = scalar_lea.hbm %s13, %s1520
          %s1523 = sshll.u32 [#allocation15], 4
          %s1524 = int_to_ptr.vmem [resolvable:$true] %s1523
          %1526 = dma.vmem_to_hbm [thread:$0]  %s1524, 16, %s1521, [#allocation9]
        $region96: #{tpu_custom_call.1} parent=67 // pred_fallthru
          _
        // Predicated region
        $region97: #{tpu_custom_call.1} parent=67 // pred_check
          %p1527 = pneg %p326
        $region98: #{tpu_custom_call.1} parent=67 // pred_check_branch
          %1529 = sbr.rel (%p1527) target = $region100
        $region99: #{tpu_custom_call.1} parent=67 // pred_region
          %1530 = dma.done [#allocation9], 16
        $region100: #{tpu_custom_call.1} parent=67 // pred_fallthru
          _
      $region68: #{tpu_custom_call.1} parent=5 // pred_fallthru
        _
      %p1531 = scmp.le.s32.totalorder 2, %s29
      // Predicated region
      $region101: #{tpu_custom_call.1} parent=5 // pred_check
        %p1532 = pneg %p1531
      $region102: #{tpu_custom_call.1} parent=5 // pred_check_branch
        %1534 = sbr.rel (%p1532) target = $region104
      $region103: #{tpu_custom_call.1} parent=5 // pred_region
        %s1535 = ssub.s32 %s29, 2
      $region104: #{tpu_custom_call.1} parent=5 // pred_fallthru
        _
    $region6: #{tpu_custom_call.1} parent=1 // loop_footer
      %s33 = sadd.s32 1, %s29
    $region7: #{tpu_custom_call.1} parent=1 // loop_footer_branch
      %28 = sbr.rel target = $region3
    $region8: #{tpu_custom_call.1} parent=1 // loop_exit
      _
    %1536 = vsyncpa [#allocation8], 1
    %s1537 = scalar_lea.sflag [#allocation8], 1
    %1538 = vsyncpa %s1537, 1
    %1539 = vsyncpa [#allocation11], 1
    %1540 = vsyncpa [#allocation14], 1
    %1541 = vsyncpa [#allocation9], 1
    %s1542 = scalar_lea.sflag [#allocation9], 1
    %1543 = vsyncpa %s1542, 1

</llo_original>
